<compile_context>
chip_gen: v7x
topology: tpu7x:2x2x1
jax: 0.10.0
libtpu: 0.0.40
codegen_flags: <defaults>
</compile_context>

<pallas_src>
import functools

import jax
import jax.numpy as jnp
from jax.experimental import pallas as pl
from jax.experimental.pallas import tpu as pltpu

THETA = 0.7
BN_EPS = 1e-5


def _down_kernel(x_ref, xt_ref, xb_ref, w1_ref, s1_ref, b1_ref,
                 w2_ref, s2_ref, b2_ref, o_ref, xpad_ref, h1pad_ref):
    # x_ref  : (1, 2*TH, W2, 2*Cin)  input strip, W-pairs folded into lanes
    # xt_ref : (1, 4,    W2, 2*Cin)  2 pooled rows above the strip (ignored at s==0)
    # xb_ref : (1, 4,    W2, 2*Cin)  2 pooled rows below the strip (ignored at last s)
    # w1_ref : (3, 3*Cin,  Cmid)     dw-packed, CD-folded conv1 weights (bf16)
    # w2_ref : (3, 3*Cmid, Cout)
    # s*/b*  : (1, C) f32            folded BatchNorm scale / shift
    # o_ref  : (1, TH, W2, Cout)
    # xpad_ref  : VMEM (TH+4, W2+2, Cin)  bf16  zero-padded pooled slab (conv1 in)
    # h1pad_ref : VMEM (TH+2, W2+2, Cmid) bf16  zero-padded hidden slab (conv2 in)
    s = pl.program_id(1)
    n_s = pl.num_programs(1)
    TH = xpad_ref.shape[0] - 4
    W2 = xpad_ref.shape[1] - 2
    Cin = xpad_ref.shape[2]
    Cmid = h1pad_ref.shape[2]
    Cout = o_ref.shape[3]
    R1 = TH + 2                      # conv1 output rows (incl. 1-row halo each side)
    cdt = xpad_ref.dtype             # bf16

    def pool2x2(v, rows):
        # (2*rows, W2, 2*Cin) -> (rows, W2, Cin): max over the 2x2 pooling window
        v = v.reshape(rows, 2, W2, 2 * Cin)
        v = jnp.maximum(v[:, 0], v[:, 1])                 # H-pair max (VPU)
        return jnp.maximum(v[..., :Cin], v[..., Cin:])    # W-pair max (lane-folded)

    pooled = pool2x2(x_ref[0], TH)
    top = pool2x2(xt_ref[0], 2)
    bot = pool2x2(xb_ref[0], 2)
    zhalo = jnp.zeros_like(top)
    top = jnp.where(s > 0, top, zhalo)          # conv1 zero padding above the image
    bot = jnp.where(s < n_s - 1, bot, zhalo)    # conv1 zero padding below the image

    # ---- assemble zero-padded pooled slab (only touched cells are rewritten) ----
    zcol1 = jnp.zeros((TH + 4, 1, Cin), cdt)
    xpad_ref[:, 0:1, :] = zcol1
    xpad_ref[:, W2 + 1:W2 + 2, :] = zcol1
    xpad_ref[0:2, 1:W2 + 1, :] = top
    xpad_ref[2:TH + 2, 1:W2 + 1, :] = pooled
    xpad_ref[TH + 2:TH + 4, 1:W2 + 1, :] = bot
    xp = xpad_ref[...]

    # ---- conv1 (3x3, pad=1): 3 MXU matmuls with the dw taps packed into K=3*Cin ----
    acc1 = jnp.zeros((R1 * W2, Cmid), jnp.float32)
    for dh in range(3):
        patch = jnp.concatenate(
            [xp[dh:dh + R1, 0:W2, :],
             xp[dh:dh + R1, 1:W2 + 1, :],
             xp[dh:dh + R1, 2:W2 + 2, :]], axis=-1).reshape(R1 * W2, 3 * Cin)
        acc1 = acc1 + jnp.dot(patch, w1_ref[dh],
                              preferred_element_type=jnp.float32)
    h1 = jnp.maximum(acc1 * s1_ref[...] + b1_ref[...], 0.0)       # BN1 + ReLU (f32)
    h1 = h1.reshape(R1, W2, Cmid).astype(cdt)

    # ---- conv2 input slab with zero padding ----
    zcol2 = jnp.zeros((R1, 1, Cmid), cdt)
    h1pad_ref[:, 1:W2 + 1, :] = h1
    h1pad_ref[:, 0:1, :] = zcol2
    h1pad_ref[:, W2 + 1:W2 + 2, :] = zcol2

    @pl.when(s == 0)                 # conv2 zero pad above the image (h1 row -1)
    def _():
        h1pad_ref[0:1, :, :] = jnp.zeros((1, W2 + 2, Cmid), cdt)

    @pl.when(s == n_s - 1)           # conv2 zero pad below the image (h1 row H2)
    def _():
        h1pad_ref[R1 - 1:R1, :, :] = jnp.zeros((1, W2 + 2, Cmid), cdt)

    h1p = h1pad_ref[...]

    # ---- conv2 (3x3, pad=1): 3 MXU matmuls with K = 3*Cmid ----
    acc2 = jnp.zeros((TH * W2, Cout), jnp.float32)
    for dh in range(3):
        patch = jnp.concatenate(
            [h1p[dh:dh + TH, 0:W2, :],
             h1p[dh:dh + TH, 1:W2 + 1, :],
             h1p[dh:dh + TH, 2:W2 + 2, :]], axis=-1).reshape(TH * W2, 3 * Cmid)
        acc2 = acc2 + jnp.dot(patch, w2_ref[dh],
                              preferred_element_type=jnp.float32)
    out = jnp.maximum(acc2 * s2_ref[...] + b2_ref[...], 0.0)       # BN2 + ReLU (f32)
    o_ref[0] = out.reshape(TH, W2, Cout).astype(o_ref.dtype)


@functools.partial(jax.jit, static_argnames=("block_rows",))
def down_forward(x_nchw, params, block_rows=None):
    """Down.forward; x_nchw: (N, Cin, H, W) -> (N, Cout, H//2, W//2)."""
    w1, s1, b1, w2, s2, b2 = params
    N, Cin, H, W = x_nchw.shape
    assert H % 4 == 0 and W % 2 == 0, "kernel requires H % 4 == 0 and even W"
    H2, W2 = H // 2, W // 2
    Cmid, Cout = w1.shape[-1], w2.shape[-1]

    # Row-strip size over pooled rows: even and dividing H2 (re-derive per chip
    # generation by passing block_rows; smaller strips for v7x's 64 MiB VMEM).
    if block_rows is None:
        TH = 2
        for cand in range(2, min(H2, 64) + 1, 2):
            if H2 % cand == 0:
                TH = cand
    else:
        TH = int(block_rows)
    assert TH % 2 == 0 and H2 % TH == 0, (TH, H2)
    n_strips = H2 // TH
    half = TH // 2

    # Glue: NCHW -> NHWC (bf16), then fold each W-pair into the lane axis.
    # The reshape is free (contiguous dims); the transpose is the unavoidable
    # layout change from the PyTorch NCHW interface.
    x = jnp.transpose(x_nchw.astype(jnp.bfloat16), (0, 2, 3, 1))
    x = x.reshape(N, H, W2, 2 * Cin)

    # Pack the 3 dw taps of each conv along the contraction dim (K = 3*C).
    w1p = w1.reshape(3, 3 * Cin, Cmid).astype(jnp.bfloat16)
    w2p = w2.reshape(3, 3 * Cmid, Cout).astype(jnp.bfloat16)

    grid_spec = pltpu.PrefetchScalarGridSpec(
        num_scalar_prefetch=0,
        grid=(N, n_strips),
        in_specs=[
            # main strip: pooled rows [s*TH, (s+1)*TH)
            pl.BlockSpec((1, 2 * TH, W2, 2 * Cin), lambda b, s: (b, s, 0, 0)),
            # top halo: pooled rows [s*TH-2, s*TH)   (clamped; masked at s==0)
            pl.BlockSpec((1, 4, W2, 2 * Cin),
                         lambda b, s: (b, jnp.maximum(s * half - 1, 0), 0, 0)),
            # bottom halo: pooled rows [(s+1)*TH, (s+1)*TH+2) (clamped; masked at last s)
            pl.BlockSpec((1, 4, W2, 2 * Cin),
                         lambda b, s: (b, jnp.minimum((s + 1) * half, H2 // 2 - 1), 0, 0)),
            pl.BlockSpec((3, 3 * Cin, Cmid), lambda b, s: (0, 0, 0)),
            pl.BlockSpec((1, Cmid), lambda b, s: (0, 0)),
            pl.BlockSpec((1, Cmid), lambda b, s: (0, 0)),
            pl.BlockSpec((3, 3 * Cmid, Cout), lambda b, s: (0, 0, 0)),
            pl.BlockSpec((1, Cout), lambda b, s: (0, 0)),
            pl.BlockSpec((1, Cout), lambda b, s: (0, 0)),
        ],
        out_specs=pl.BlockSpec((1, TH, W2, Cout), lambda b, s: (b, s, 0, 0)),
        scratch_shapes=[
            pltpu.VMEM((TH + 4, W2 + 2, Cin), jnp.bfloat16),
            pltpu.VMEM((TH + 2, W2 + 2, Cmid), jnp.bfloat16),
        ],
    )

    # VMEM budget from the chosen strip (double-buffered blocks + scratch + temps).
    bb = 2  # bf16 bytes
    blk_in = (2 * TH + 8) * W2 * 2 * Cin * bb
    blk_w = (9 * Cin * Cmid + 9 * Cmid * Cout) * bb + 2 * (Cmid + Cout) * 4
    blk_out = TH * W2 * Cout * 4
    scratch = (TH + 4) * (W2 + 2) * Cin * bb + (TH + 2) * (W2 + 2) * Cmid * bb
    tmp = (TH + 2) * W2 * (3 * max(Cin, Cmid) * bb + 4 * max(Cmid, Cout)) * 2
    vmem_limit = int(min(max(2 * (blk_in + blk_w + blk_out) + scratch + 2 * tmp,
                             32 * 1024 * 1024), 64 * 1024 * 1024))

    out_nhwc = pl.pallas_call(
        _down_kernel,
        out_shape=jax.ShapeDtypeStruct((N, H2, W2, Cout), jnp.float32),
        grid_spec=grid_spec,
        compiler_params=pltpu.CompilerParams(
            dimension_semantics=("parallel", "parallel"),
            vmem_limit_bytes=vmem_limit),
    )(x, x, x, w1p, s1, b1, w2p, s2, b2)
    return jnp.transpose(out_nhwc, (0, 3, 1, 2))          # back to NCHW


def init_params(key, in_channels, out_channels):
    """Deterministic synthetic params for Down(in_channels, out_channels)."""
    mid = out_channels  # DoubleConv: mid_channels defaults to out_channels
    k = jax.random.split(key, 10)
    w1_raw = 0.2 * jax.random.normal(k[0], (3, 3, in_channels, mid), jnp.float32)
    w2_raw = 0.2 * jax.random.normal(k[1], (3, 3, mid, out_channels), jnp.float32)
    # Fold Conv2d_cd (theta=0.7): center tap -= theta * sum over the 3x3 taps
    w1 = w1_raw.at[1, 1].add(-THETA * w1_raw.sum(axis=(0, 1)))
    w2 = w2_raw.at[1, 1].add(-THETA * w2_raw.sum(axis=(0, 1)))

    def bn(kg, kb, km, kv, c):
        gamma = 1.0 + 0.1 * jax.random.normal(kg, (c,), jnp.float32)
        beta = 0.1 * jax.random.normal(kb, (c,), jnp.float32)
        mean = 0.1 * jax.random.normal(km, (c,), jnp.float32)
        var = 1.0 + 0.1 * jnp.abs(jax.random.normal(kv, (c,), jnp.float32))
        scale = gamma / jnp.sqrt(var + BN_EPS)
        shift = beta - mean * scale
        return scale.reshape(1, c), shift.reshape(1, c)

    s1, b1 = bn(k[2], k[3], k[4], k[5], mid)
    s2, b2 = bn(k[6], k[7], k[8], k[9], out_channels)
    return w1, s1, b1, w2, s2, b2


def down_reference(x_nchw, params):
    """Pure-JAX/XLA reference (same folded params, bf16-rounded like the kernel)."""
    w1, s1, b1, w2, s2, b2 = params
    f = lambda a: a.astype(jnp.bfloat16).astype(jnp.float32)
    x = jnp.transpose(f(x_nchw), (0, 2, 3, 1))
    N, H, W, Cin = x.shape
    xp = jnp.max(x.reshape(N, H // 2, 2, W // 2, 2, Cin), axis=(2, 4))

    def conv(a, w):
        dn = jax.lax.conv_dimension_numbers(a.shape, w.shape, ("NHWC", "HWIO", "NHWC"))
        return jax.lax.conv_general_dilated(a, f(w), (1, 1), "SAME",
                                            dimension_numbers=dn,
                                            precision=jax.lax.Precision.HIGHEST)

    h = jnp.maximum(conv(xp, w1) * s1.reshape(1, 1, 1, -1) + b1.reshape(1, 1, 1, -1), 0.0)
    o = jnp.maximum(conv(f(h), w2) * s2.reshape(1, 1, 1, -1) + b2.reshape(1, 1, 1, -1), 0.0)
    return jnp.transpose(o, (0, 3, 1, 2))


if __name__ == "__main__":
    key = jax.random.PRNGKey(0)
    kx, kp, kx2, kp2 = jax.random.split(key, 4)

    # Primary test: batch=2, Cin=4, 16x16 spatial, Cout=8; 2 row-strips (halos exercised).
    N, Cin, H, W, Cout = 2, 4, 16, 16, 8
    x = jax.random.normal(kx, (N, Cin, H, W), jnp.float32)
    params = init_params(kp, Cin, Cout)
    y = down_forward(x, params, block_rows=4)
    jax.block_until_ready(y)
    assert y.shape == (N, Cout, H // 2, W // 2), y.shape
    y_ref = down_reference(x, params)
    err = float(jnp.max(jnp.abs(y - y_ref)))
    assert err < 2e-2, f"mismatch vs reference: {err}"

    # Second config: odd channel count, non-square spatial, auto strip size (1 strip).
    N2, Cin2, Hb, Wb, Cout2 = 1, 3, 24, 16, 8
    x2 = jax.random.normal(kx2, (N2, Cin2, Hb, Wb), jnp.float32)
    params2 = init_params(kp2, Cin2, Cout2)
    y2 = down_forward(x2, params2)
    jax.block_until_ready(y2)
    assert y2.shape == (N2, Cout2, Hb // 2, Wb // 2), y2.shape
    y2_ref = down_reference(x2, params2)
    err2 = float(jnp.max(jnp.abs(y2 - y2_ref)))
    assert err2 < 2e-2, f"mismatch vs reference (cfg2): {err2}"

    print("KERNEL_OK")
</pallas_src>

<mosaic_0001>
module attributes {stable_mosaic.version = 11 : i64} {
  func.func @_down_kernel(%arg0: i32, %arg1: i32, %arg2: memref<1x8x8x8xbf16, #tpu.memory_space<vmem>>, %arg3: memref<1x4x8x8xbf16, #tpu.memory_space<vmem>>, %arg4: memref<1x4x8x8xbf16, #tpu.memory_space<vmem>>, %arg5: memref<3x12x8xbf16, #tpu.memory_space<vmem>>, %arg6: memref<1x8xf32, #tpu.memory_space<vmem>>, %arg7: memref<1x8xf32, #tpu.memory_space<vmem>>, %arg8: memref<3x24x8xbf16, #tpu.memory_space<vmem>>, %arg9: memref<1x8xf32, #tpu.memory_space<vmem>>, %arg10: memref<1x8xf32, #tpu.memory_space<vmem>>, %arg11: memref<1x4x8x8xf32, #tpu.memory_space<vmem>>, %arg12: memref<8x10x4xbf16, #tpu.memory_space<vmem>>, %arg13: memref<6x10x8xbf16, #tpu.memory_space<vmem>>) attributes {dimension_semantics = [#tpu.dimension_semantics<parallel>, #tpu.dimension_semantics<parallel>], iteration_bounds = array<i64: 2, 2>, scalar_prefetch = 0 : i64, scratch_operands = 2 : i64, tpu.core_type = #tpu.core_type<tc>, window_params = [{transform_indices = @transform_0, window_bounds = array<i64: 1, 8, 8, 8>}, {transform_indices = @transform_1, window_bounds = array<i64: 1, 4, 8, 8>}, {transform_indices = @transform_2, window_bounds = array<i64: 1, 4, 8, 8>}, {pipeline_mode = #tpu.pipeline_mode<synchronous>, transform_indices = @transform_3, window_bounds = array<i64: 3, 12, 8>}, {pipeline_mode = #tpu.pipeline_mode<synchronous>, transform_indices = @transform_4, window_bounds = array<i64: 1, 8>}, {pipeline_mode = #tpu.pipeline_mode<synchronous>, transform_indices = @transform_5, window_bounds = array<i64: 1, 8>}, {pipeline_mode = #tpu.pipeline_mode<synchronous>, transform_indices = @transform_6, window_bounds = array<i64: 3, 24, 8>}, {pipeline_mode = #tpu.pipeline_mode<synchronous>, transform_indices = @transform_7, window_bounds = array<i64: 1, 8>}, {pipeline_mode = #tpu.pipeline_mode<synchronous>, transform_indices = @transform_8, window_bounds = array<i64: 1, 8>}, {transform_indices = @transform_9, window_bounds = array<i64: 1, 4, 8, 8>}]} {
    %c0 = arith.constant 0 : index
    %c0_0 = arith.constant 0 : index
    %c0_1 = arith.constant 0 : index
    %c0_2 = arith.constant 0 : index
    %0 = vector.load %arg2[%c0, %c0_0, %c0_1, %c0_2] : memref<1x8x8x8xbf16, #tpu.memory_space<vmem>>, vector<1x8x8x8xbf16>
    %1 = vector.shape_cast %0 : vector<1x8x8x8xbf16> to vector<8x8x8xbf16>
    %2 = vector.shape_cast %1 : vector<8x8x8xbf16> to vector<4x2x8x8xbf16>
    %3 = vector.extract_strided_slice %2 {offsets = [0, 0, 0, 0], sizes = [4, 1, 8, 8], strides = [1, 1, 1, 1]} : vector<4x2x8x8xbf16> to vector<4x1x8x8xbf16>
    %4 = vector.shape_cast %3 : vector<4x1x8x8xbf16> to vector<4x8x8xbf16>
    %5 = vector.extract_strided_slice %2 {offsets = [0, 1, 0, 0], sizes = [4, 1, 8, 8], strides = [1, 1, 1, 1]} : vector<4x2x8x8xbf16> to vector<4x1x8x8xbf16>
    %6 = vector.shape_cast %5 : vector<4x1x8x8xbf16> to vector<4x8x8xbf16>
    %7 = arith.maximumf %4, %6 : vector<4x8x8xbf16>
    %8 = vector.extract_strided_slice %7 {offsets = [0, 0, 0], sizes = [4, 8, 4], strides = [1, 1, 1]} : vector<4x8x8xbf16> to vector<4x8x4xbf16>
    %9 = vector.extract_strided_slice %7 {offsets = [0, 0, 4], sizes = [4, 8, 4], strides = [1, 1, 1]} : vector<4x8x8xbf16> to vector<4x8x4xbf16>
    %10 = arith.maximumf %8, %9 : vector<4x8x4xbf16>
    %c0_3 = arith.constant 0 : index
    %c0_4 = arith.constant 0 : index
    %c0_5 = arith.constant 0 : index
    %c0_6 = arith.constant 0 : index
    %11 = vector.load %arg3[%c0_3, %c0_4, %c0_5, %c0_6] : memref<1x4x8x8xbf16, #tpu.memory_space<vmem>>, vector<1x4x8x8xbf16>
    %12 = vector.shape_cast %11 : vector<1x4x8x8xbf16> to vector<4x8x8xbf16>
    %13 = vector.shape_cast %12 : vector<4x8x8xbf16> to vector<2x2x8x8xbf16>
    %14 = vector.extract_strided_slice %13 {offsets = [0, 0, 0, 0], sizes = [2, 1, 8, 8], strides = [1, 1, 1, 1]} : vector<2x2x8x8xbf16> to vector<2x1x8x8xbf16>
    %15 = vector.shape_cast %14 : vector<2x1x8x8xbf16> to vector<2x8x8xbf16>
    %16 = vector.extract_strided_slice %13 {offsets = [0, 1, 0, 0], sizes = [2, 1, 8, 8], strides = [1, 1, 1, 1]} : vector<2x2x8x8xbf16> to vector<2x1x8x8xbf16>
    %17 = vector.shape_cast %16 : vector<2x1x8x8xbf16> to vector<2x8x8xbf16>
    %18 = arith.maximumf %15, %17 : vector<2x8x8xbf16>
    %19 = vector.extract_strided_slice %18 {offsets = [0, 0, 0], sizes = [2, 8, 4], strides = [1, 1, 1]} : vector<2x8x8xbf16> to vector<2x8x4xbf16>
    %20 = vector.extract_strided_slice %18 {offsets = [0, 0, 4], sizes = [2, 8, 4], strides = [1, 1, 1]} : vector<2x8x8xbf16> to vector<2x8x4xbf16>
    %21 = arith.maximumf %19, %20 : vector<2x8x4xbf16>
    %c0_7 = arith.constant 0 : index
    %c0_8 = arith.constant 0 : index
    %c0_9 = arith.constant 0 : index
    %c0_10 = arith.constant 0 : index
    %22 = vector.load %arg4[%c0_7, %c0_8, %c0_9, %c0_10] : memref<1x4x8x8xbf16, #tpu.memory_space<vmem>>, vector<1x4x8x8xbf16>
    %23 = vector.shape_cast %22 : vector<1x4x8x8xbf16> to vector<4x8x8xbf16>
    %24 = vector.shape_cast %23 : vector<4x8x8xbf16> to vector<2x2x8x8xbf16>
    %25 = vector.extract_strided_slice %24 {offsets = [0, 0, 0, 0], sizes = [2, 1, 8, 8], strides = [1, 1, 1, 1]} : vector<2x2x8x8xbf16> to vector<2x1x8x8xbf16>
    %26 = vector.shape_cast %25 : vector<2x1x8x8xbf16> to vector<2x8x8xbf16>
    %27 = vector.extract_strided_slice %24 {offsets = [0, 1, 0, 0], sizes = [2, 1, 8, 8], strides = [1, 1, 1, 1]} : vector<2x2x8x8xbf16> to vector<2x1x8x8xbf16>
    %28 = vector.shape_cast %27 : vector<2x1x8x8xbf16> to vector<2x8x8xbf16>
    %29 = arith.maximumf %26, %28 : vector<2x8x8xbf16>
    %30 = vector.extract_strided_slice %29 {offsets = [0, 0, 0], sizes = [2, 8, 4], strides = [1, 1, 1]} : vector<2x8x8xbf16> to vector<2x8x4xbf16>
    %31 = vector.extract_strided_slice %29 {offsets = [0, 0, 4], sizes = [2, 8, 4], strides = [1, 1, 1]} : vector<2x8x8xbf16> to vector<2x8x4xbf16>
    %32 = arith.maximumf %30, %31 : vector<2x8x4xbf16>
    %cst = arith.constant 0.000000e+00 : bf16
    %33 = vector.broadcast %cst : bf16 to vector<2x8x4xbf16>
    %c0_i32 = arith.constant 0 : i32
    %34 = arith.cmpi sgt, %arg1, %c0_i32 : i32
    %35 = arith.select %34, %21, %33 : vector<2x8x4xbf16>
    %c1_i32 = arith.constant 1 : i32
    %36 = arith.cmpi slt, %arg1, %c1_i32 : i32
    %37 = arith.select %36, %32, %33 : vector<2x8x4xbf16>
    %cst_11 = arith.constant 0.000000e+00 : bf16
    %38 = vector.broadcast %cst_11 : bf16 to vector<8x1x4xbf16>
    %c0_12 = arith.constant 0 : index
    %c0_13 = arith.constant 0 : index
    %c0_14 = arith.constant 0 : index
    %39 = vector.load %arg12[%c0_12, %c0_13, %c0_14] : memref<8x10x4xbf16, #tpu.memory_space<vmem>>, vector<8x1x4xbf16>
    tpu.vector_store %arg12[%c0_12, %c0_13, %c0_14], %38 {strides = array<i32>} : memref<8x10x4xbf16, #tpu.memory_space<vmem>>, vector<8x1x4xbf16>,
    %c0_15 = arith.constant 0 : index
    %c9 = arith.constant 9 : index
    %c0_16 = arith.constant 0 : index
    %40 = vector.load %arg12[%c0_15, %c9, %c0_16] : memref<8x10x4xbf16, #tpu.memory_space<vmem>>, vector<8x1x4xbf16>
    tpu.vector_store %arg12[%c0_15, %c9, %c0_16], %38 {strides = array<i32>} : memref<8x10x4xbf16, #tpu.memory_space<vmem>>, vector<8x1x4xbf16>,
    %c0_17 = arith.constant 0 : index
    %c1 = arith.constant 1 : index
    %c0_18 = arith.constant 0 : index
    %41 = vector.load %arg12[%c0_17, %c1, %c0_18] : memref<8x10x4xbf16, #tpu.memory_space<vmem>>, vector<2x8x4xbf16>
    tpu.vector_store %arg12[%c0_17, %c1, %c0_18], %35 {strides = array<i32>} : memref<8x10x4xbf16, #tpu.memory_space<vmem>>, vector<2x8x4xbf16>,
    %c2 = arith.constant 2 : index
    %c1_19 = arith.constant 1 : index
    %c0_20 = arith.constant 0 : index
    %42 = vector.load %arg12[%c2, %c1_19, %c0_20] : memref<8x10x4xbf16, #tpu.memory_space<vmem>>, vector<4x8x4xbf16>
    tpu.vector_store %arg12[%c2, %c1_19, %c0_20], %10 {strides = array<i32>} : memref<8x10x4xbf16, #tpu.memory_space<vmem>>, vector<4x8x4xbf16>,
    %c6 = arith.constant 6 : index
    %c1_21 = arith.constant 1 : index
    %c0_22 = arith.constant 0 : index
    %43 = vector.load %arg12[%c6, %c1_21, %c0_22] : memref<8x10x4xbf16, #tpu.memory_space<vmem>>, vector<2x8x4xbf16>
    tpu.vector_store %arg12[%c6, %c1_21, %c0_22], %37 {strides = array<i32>} : memref<8x10x4xbf16, #tpu.memory_space<vmem>>, vector<2x8x4xbf16>,
    %c0_23 = arith.constant 0 : index
    %c0_24 = arith.constant 0 : index
    %c0_25 = arith.constant 0 : index
    %44 = vector.load %arg12[%c0_23, %c0_24, %c0_25] : memref<8x10x4xbf16, #tpu.memory_space<vmem>>, vector<8x10x4xbf16>
    %cst_26 = arith.constant 0.000000e+00 : f32
    %45 = vector.broadcast %cst_26 : f32 to vector<48x8xf32>
    %46 = vector.extract_strided_slice %44 {offsets = [0, 0, 0], sizes = [6, 8, 4], strides = [1, 1, 1]} : vector<8x10x4xbf16> to vector<6x8x4xbf16>
    %47 = vector.extract_strided_slice %44 {offsets = [0, 1, 0], sizes = [6, 8, 4], strides = [1, 1, 1]} : vector<8x10x4xbf16> to vector<6x8x4xbf16>
    %48 = vector.extract_strided_slice %44 {offsets = [0, 2, 0], sizes = [6, 8, 4], strides = [1, 1, 1]} : vector<8x10x4xbf16> to vector<6x8x4xbf16>
    %49 = tpu.concatenate %46, %47, %48 in 2 : vector<6x8x4xbf16>, vector<6x8x4xbf16>, vector<6x8x4xbf16> -> vector<6x8x12xbf16>
    %50 = vector.shape_cast %49 : vector<6x8x12xbf16> to vector<48x12xbf16>
    %c0_27 = arith.constant 0 : index
    %c0_28 = arith.constant 0 : index
    %c0_29 = arith.constant 0 : index
    %51 = vector.load %arg5[%c0_27, %c0_28, %c0_29] : memref<3x12x8xbf16, #tpu.memory_space<vmem>>, vector<1x12x8xbf16>
    %52 = vector.shape_cast %51 : vector<1x12x8xbf16> to vector<12x8xbf16>
    %cst_30 = arith.constant dense<0.000000e+00> : vector<48x8xf32>
    %53 = tpu.matmul %50, %52, %cst_30 {dimension_numbers = #tpu.dot_dimension_numbers<[1], [0], [0], [1], [0, 0, 1, 1], [], []>} : vector<48x12xbf16>, vector<12x8xbf16>, vector<48x8xf32> -> vector<48x8xf32>
    %54 = arith.addf %45, %53 : vector<48x8xf32>
    %55 = vector.extract_strided_slice %44 {offsets = [1, 0, 0], sizes = [6, 8, 4], strides = [1, 1, 1]} : vector<8x10x4xbf16> to vector<6x8x4xbf16>
    %56 = vector.extract_strided_slice %44 {offsets = [1, 1, 0], sizes = [6, 8, 4], strides = [1, 1, 1]} : vector<8x10x4xbf16> to vector<6x8x4xbf16>
    %57 = vector.extract_strided_slice %44 {offsets = [1, 2, 0], sizes = [6, 8, 4], strides = [1, 1, 1]} : vector<8x10x4xbf16> to vector<6x8x4xbf16>
    %58 = tpu.concatenate %55, %56, %57 in 2 : vector<6x8x4xbf16>, vector<6x8x4xbf16>, vector<6x8x4xbf16> -> vector<6x8x12xbf16>
    %59 = vector.shape_cast %58 : vector<6x8x12xbf16> to vector<48x12xbf16>
    %c1_31 = arith.constant 1 : index
    %c0_32 = arith.constant 0 : index
    %c0_33 = arith.constant 0 : index
    %60 = vector.load %arg5[%c1_31, %c0_32, %c0_33] : memref<3x12x8xbf16, #tpu.memory_space<vmem>>, vector<1x12x8xbf16>
    %61 = vector.shape_cast %60 : vector<1x12x8xbf16> to vector<12x8xbf16>
    %cst_34 = arith.constant dense<0.000000e+00> : vector<48x8xf32>
    %62 = tpu.matmul %59, %61, %cst_34 {dimension_numbers = #tpu.dot_dimension_numbers<[1], [0], [0], [1], [0, 0, 1, 1], [], []>} : vector<48x12xbf16>, vector<12x8xbf16>, vector<48x8xf32> -> vector<48x8xf32>
    %63 = arith.addf %54, %62 : vector<48x8xf32>
    %64 = vector.extract_strided_slice %44 {offsets = [2, 0, 0], sizes = [6, 8, 4], strides = [1, 1, 1]} : vector<8x10x4xbf16> to vector<6x8x4xbf16>
    %65 = vector.extract_strided_slice %44 {offsets = [2, 1, 0], sizes = [6, 8, 4], strides = [1, 1, 1]} : vector<8x10x4xbf16> to vector<6x8x4xbf16>
    %66 = vector.extract_strided_slice %44 {offsets = [2, 2, 0], sizes = [6, 8, 4], strides = [1, 1, 1]} : vector<8x10x4xbf16> to vector<6x8x4xbf16>
    %67 = tpu.concatenate %64, %65, %66 in 2 : vector<6x8x4xbf16>, vector<6x8x4xbf16>, vector<6x8x4xbf16> -> vector<6x8x12xbf16>
    %68 = vector.shape_cast %67 : vector<6x8x12xbf16> to vector<48x12xbf16>
    %c2_35 = arith.constant 2 : index
    %c0_36 = arith.constant 0 : index
    %c0_37 = arith.constant 0 : index
    %69 = vector.load %arg5[%c2_35, %c0_36, %c0_37] : memref<3x12x8xbf16, #tpu.memory_space<vmem>>, vector<1x12x8xbf16>
    %70 = vector.shape_cast %69 : vector<1x12x8xbf16> to vector<12x8xbf16>
    %cst_38 = arith.constant dense<0.000000e+00> : vector<48x8xf32>
    %71 = tpu.matmul %68, %70, %cst_38 {dimension_numbers = #tpu.dot_dimension_numbers<[1], [0], [0], [1], [0, 0, 1, 1], [], []>} : vector<48x12xbf16>, vector<12x8xbf16>, vector<48x8xf32> -> vector<48x8xf32>
    %72 = arith.addf %63, %71 : vector<48x8xf32>
    %c0_39 = arith.constant 0 : index
    %c0_40 = arith.constant 0 : index
    %73 = vector.load %arg6[%c0_39, %c0_40] : memref<1x8xf32, #tpu.memory_space<vmem>>, vector<1x8xf32>
    %74 = vector.broadcast %73 : vector<1x8xf32> to vector<48x8xf32>
    %75 = arith.mulf %72, %74 : vector<48x8xf32>
    %c0_41 = arith.constant 0 : index
    %c0_42 = arith.constant 0 : index
    %76 = vector.load %arg7[%c0_41, %c0_42] : memref<1x8xf32, #tpu.memory_space<vmem>>, vector<1x8xf32>
    %77 = vector.broadcast %76 : vector<1x8xf32> to vector<48x8xf32>
    %78 = arith.addf %75, %77 : vector<48x8xf32>
    %cst_43 = arith.constant 0.000000e+00 : f32
    %79 = vector.broadcast %cst_43 : f32 to vector<48x8xf32>
    %80 = arith.maximumf %78, %79 : vector<48x8xf32>
    %81 = vector.shape_cast %80 : vector<48x8xf32> to vector<6x8x8xf32>
    %82 = arith.truncf %81 : vector<6x8x8xf32> to vector<6x8x8xbf16>
    %cst_44 = arith.constant 0.000000e+00 : bf16
    %83 = vector.broadcast %cst_44 : bf16 to vector<6x1x8xbf16>
    %c0_45 = arith.constant 0 : index
    %c1_46 = arith.constant 1 : index
    %c0_47 = arith.constant 0 : index
    %84 = vector.load %arg13[%c0_45, %c1_46, %c0_47] : memref<6x10x8xbf16, #tpu.memory_space<vmem>>, vector<6x8x8xbf16>
    tpu.vector_store %arg13[%c0_45, %c1_46, %c0_47], %82 {strides = array<i32>} : memref<6x10x8xbf16, #tpu.memory_space<vmem>>, vector<6x8x8xbf16>,
    %c0_48 = arith.constant 0 : index
    %c0_49 = arith.constant 0 : index
    %c0_50 = arith.constant 0 : index
    %85 = vector.load %arg13[%c0_48, %c0_49, %c0_50] : memref<6x10x8xbf16, #tpu.memory_space<vmem>>, vector<6x1x8xbf16>
    tpu.vector_store %arg13[%c0_48, %c0_49, %c0_50], %83 {strides = array<i32>} : memref<6x10x8xbf16, #tpu.memory_space<vmem>>, vector<6x1x8xbf16>,
    %c0_51 = arith.constant 0 : index
    %c9_52 = arith.constant 9 : index
    %c0_53 = arith.constant 0 : index
    %86 = vector.load %arg13[%c0_51, %c9_52, %c0_53] : memref<6x10x8xbf16, #tpu.memory_space<vmem>>, vector<6x1x8xbf16>
    tpu.vector_store %arg13[%c0_51, %c9_52, %c0_53], %83 {strides = array<i32>} : memref<6x10x8xbf16, #tpu.memory_space<vmem>>, vector<6x1x8xbf16>,
    %c0_i32_54 = arith.constant 0 : i32
    %87 = arith.cmpi eq, %arg1, %c0_i32_54 : i32
    %88 = arith.extui %87 : i1 to i32
    %c0_i32_55 = arith.constant 0 : i32
    %89 = arith.cmpi ne, %88, %c0_i32_55 : i32
    scf.if %89 {
      %cst_83 = arith.constant 0.000000e+00 : bf16
      %134 = vector.broadcast %cst_83 : bf16 to vector<1x10x8xbf16>
      %c0_84 = arith.constant 0 : index
      %c0_85 = arith.constant 0 : index
      %c0_86 = arith.constant 0 : index
      %135 = vector.load %arg13[%c0_84, %c0_85, %c0_86] : memref<6x10x8xbf16, #tpu.memory_space<vmem>>, vector<1x10x8xbf16>
      tpu.vector_store %arg13[%c0_84, %c0_85, %c0_86], %134 {strides = array<i32>} : memref<6x10x8xbf16, #tpu.memory_space<vmem>>, vector<1x10x8xbf16>,
    } else {
    }
    %c1_i32_56 = arith.constant 1 : i32
    %90 = arith.cmpi eq, %arg1, %c1_i32_56 : i32
    %91 = arith.extui %90 : i1 to i32
    %c0_i32_57 = arith.constant 0 : i32
    %92 = arith.cmpi ne, %91, %c0_i32_57 : i32
    scf.if %92 {
      %cst_83 = arith.constant 0.000000e+00 : bf16
      %134 = vector.broadcast %cst_83 : bf16 to vector<1x10x8xbf16>
      %c5 = arith.constant 5 : index
      %c0_84 = arith.constant 0 : index
      %c0_85 = arith.constant 0 : index
      %135 = vector.load %arg13[%c5, %c0_84, %c0_85] : memref<6x10x8xbf16, #tpu.memory_space<vmem>>, vector<1x10x8xbf16>
      tpu.vector_store %arg13[%c5, %c0_84, %c0_85], %134 {strides = array<i32>} : memref<6x10x8xbf16, #tpu.memory_space<vmem>>, vector<1x10x8xbf16>,
    } else {
    }
    %c0_58 = arith.constant 0 : index
    %c0_59 = arith.constant 0 : index
    %c0_60 = arith.constant 0 : index
    %93 = vector.load %arg13[%c0_58, %c0_59, %c0_60] : memref<6x10x8xbf16, #tpu.memory_space<vmem>>, vector<6x10x8xbf16>
    %cst_61 = arith.constant 0.000000e+00 : f32
    %94 = vector.broadcast %cst_61 : f32 to vector<32x8xf32>
    %95 = vector.extract_strided_slice %93 {offsets = [0, 0, 0], sizes = [4, 8, 8], strides = [1, 1, 1]} : vector<6x10x8xbf16> to vector<4x8x8xbf16>
    %96 = vector.extract_strided_slice %93 {offsets = [0, 1, 0], sizes = [4, 8, 8], strides = [1, 1, 1]} : vector<6x10x8xbf16> to vector<4x8x8xbf16>
    %97 = vector.extract_strided_slice %93 {offsets = [0, 2, 0], sizes = [4, 8, 8], strides = [1, 1, 1]} : vector<6x10x8xbf16> to vector<4x8x8xbf16>
    %98 = tpu.concatenate %95, %96, %97 in 2 : vector<4x8x8xbf16>, vector<4x8x8xbf16>, vector<4x8x8xbf16> -> vector<4x8x24xbf16>
    %99 = vector.shape_cast %98 : vector<4x8x24xbf16> to vector<32x24xbf16>
    %c0_62 = arith.constant 0 : index
    %c0_63 = arith.constant 0 : index
    %c0_64 = arith.constant 0 : index
    %100 = vector.load %arg8[%c0_62, %c0_63, %c0_64] : memref<3x24x8xbf16, #tpu.memory_space<vmem>>, vector<1x24x8xbf16>
    %101 = vector.shape_cast %100 : vector<1x24x8xbf16> to vector<24x8xbf16>
    %cst_65 = arith.constant dense<0.000000e+00> : vector<32x8xf32>
    %102 = tpu.matmul %99, %101, %cst_65 {dimension_numbers = #tpu.dot_dimension_numbers<[1], [0], [0], [1], [0, 0, 1, 1], [], []>} : vector<32x24xbf16>, vector<24x8xbf16>, vector<32x8xf32> -> vector<32x8xf32>
    %103 = arith.addf %94, %102 : vector<32x8xf32>
    %104 = vector.extract_strided_slice %93 {offsets = [1, 0, 0], sizes = [4, 8, 8], strides = [1, 1, 1]} : vector<6x10x8xbf16> to vector<4x8x8xbf16>
    %105 = vector.extract_strided_slice %93 {offsets = [1, 1, 0], sizes = [4, 8, 8], strides = [1, 1, 1]} : vector<6x10x8xbf16> to vector<4x8x8xbf16>
    %106 = vector.extract_strided_slice %93 {offsets = [1, 2, 0], sizes = [4, 8, 8], strides = [1, 1, 1]} : vector<6x10x8xbf16> to vector<4x8x8xbf16>
    %107 = tpu.concatenate %104, %105, %106 in 2 : vector<4x8x8xbf16>, vector<4x8x8xbf16>, vector<4x8x8xbf16> -> vector<4x8x24xbf16>
    %108 = vector.shape_cast %107 : vector<4x8x24xbf16> to vector<32x24xbf16>
    %c1_66 = arith.constant 1 : index
    %c0_67 = arith.constant 0 : index
    %c0_68 = arith.constant 0 : index
    %109 = vector.load %arg8[%c1_66, %c0_67, %c0_68] : memref<3x24x8xbf16, #tpu.memory_space<vmem>>, vector<1x24x8xbf16>
    %110 = vector.shape_cast %109 : vector<1x24x8xbf16> to vector<24x8xbf16>
    %cst_69 = arith.constant dense<0.000000e+00> : vector<32x8xf32>
    %111 = tpu.matmul %108, %110, %cst_69 {dimension_numbers = #tpu.dot_dimension_numbers<[1], [0], [0], [1], [0, 0, 1, 1], [], []>} : vector<32x24xbf16>, vector<24x8xbf16>, vector<32x8xf32> -> vector<32x8xf32>
    %112 = arith.addf %103, %111 : vector<32x8xf32>
    %113 = vector.extract_strided_slice %93 {offsets = [2, 0, 0], sizes = [4, 8, 8], strides = [1, 1, 1]} : vector<6x10x8xbf16> to vector<4x8x8xbf16>
    %114 = vector.extract_strided_slice %93 {offsets = [2, 1, 0], sizes = [4, 8, 8], strides = [1, 1, 1]} : vector<6x10x8xbf16> to vector<4x8x8xbf16>
    %115 = vector.extract_strided_slice %93 {offsets = [2, 2, 0], sizes = [4, 8, 8], strides = [1, 1, 1]} : vector<6x10x8xbf16> to vector<4x8x8xbf16>
    %116 = tpu.concatenate %113, %114, %115 in 2 : vector<4x8x8xbf16>, vector<4x8x8xbf16>, vector<4x8x8xbf16> -> vector<4x8x24xbf16>
    %117 = vector.shape_cast %116 : vector<4x8x24xbf16> to vector<32x24xbf16>
    %c2_70 = arith.constant 2 : index
    %c0_71 = arith.constant 0 : index
    %c0_72 = arith.constant 0 : index
    %118 = vector.load %arg8[%c2_70, %c0_71, %c0_72] : memref<3x24x8xbf16, #tpu.memory_space<vmem>>, vector<1x24x8xbf16>
    %119 = vector.shape_cast %118 : vector<1x24x8xbf16> to vector<24x8xbf16>
    %cst_73 = arith.constant dense<0.000000e+00> : vector<32x8xf32>
    %120 = tpu.matmul %117, %119, %cst_73 {dimension_numbers = #tpu.dot_dimension_numbers<[1], [0], [0], [1], [0, 0, 1, 1], [], []>} : vector<32x24xbf16>, vector<24x8xbf16>, vector<32x8xf32> -> vector<32x8xf32>
    %121 = arith.addf %112, %120 : vector<32x8xf32>
    %c0_74 = arith.constant 0 : index
    %c0_75 = arith.constant 0 : index
    %122 = vector.load %arg9[%c0_74, %c0_75] : memref<1x8xf32, #tpu.memory_space<vmem>>, vector<1x8xf32>
    %123 = vector.broadcast %122 : vector<1x8xf32> to vector<32x8xf32>
    %124 = arith.mulf %121, %123 : vector<32x8xf32>
    %c0_76 = arith.constant 0 : index
    %c0_77 = arith.constant 0 : index
    %125 = vector.load %arg10[%c0_76, %c0_77] : memref<1x8xf32, #tpu.memory_space<vmem>>, vector<1x8xf32>
    %126 = vector.broadcast %125 : vector<1x8xf32> to vector<32x8xf32>
    %127 = arith.addf %124, %126 : vector<32x8xf32>
    %cst_78 = arith.constant 0.000000e+00 : f32
    %128 = vector.broadcast %cst_78 : f32 to vector<32x8xf32>
    %129 = arith.maximumf %127, %128 : vector<32x8xf32>
    %130 = vector.shape_cast %129 : vector<32x8xf32> to vector<4x8x8xf32>
    %c0_79 = arith.constant 0 : index
    %c0_80 = arith.constant 0 : index
    %c0_81 = arith.constant 0 : index
    %c0_82 = arith.constant 0 : index
    %131 = vector.load %arg11[%c0_79, %c0_80, %c0_81, %c0_82] : memref<1x4x8x8xf32, #tpu.memory_space<vmem>>, vector<1x4x8x8xf32>
    %132 = vector.shape_cast %131 : vector<1x4x8x8xf32> to vector<4x8x8xf32>
    %133 = vector.shape_cast %130 : vector<4x8x8xf32> to vector<1x4x8x8xf32>
    tpu.vector_store %arg11[%c0_79, %c0_80, %c0_81, %c0_82], %133 {strides = array<i32>} : memref<1x4x8x8xf32, #tpu.memory_space<vmem>>, vector<1x4x8x8xf32>,
    return
  }
  func.func @transform_0(%arg0: i32, %arg1: i32) -> (i32, i32, i32, i32) {
    %c0_i32 = arith.constant 0 : i32
    %c0_i32_0 = arith.constant 0 : i32
    %c0_i32_1 = arith.constant 0 : i32
    return %arg0, %arg1, %c0_i32, %c0_i32_0 : i32, i32, i32, i32
  }
  func.func @transform_1(%arg0: i32, %arg1: i32) -> (i32, i32, i32, i32) {
    %c2_i32 = arith.constant 2 : i32
    %0 = arith.muli %arg1, %c2_i32 : i32
    %c1_i32 = arith.constant 1 : i32
    %1 = arith.subi %0, %c1_i32 : i32
    %c0_i32 = arith.constant 0 : i32
    %2 = arith.maxsi %1, %c0_i32 : i32
    %c0_i32_0 = arith.constant 0 : i32
    %c0_i32_1 = arith.constant 0 : i32
    %c0_i32_2 = arith.constant 0 : i32
    return %arg0, %2, %c0_i32_0, %c0_i32_1 : i32, i32, i32, i32
  }
  func.func @transform_2(%arg0: i32, %arg1: i32) -> (i32, i32, i32, i32) {
    %c1_i32 = arith.constant 1 : i32
    %0 = arith.addi %arg1, %c1_i32 : i32
    %c2_i32 = arith.constant 2 : i32
    %1 = arith.muli %0, %c2_i32 : i32
    %c3_i32 = arith.constant 3 : i32
    %2 = arith.minsi %1, %c3_i32 : i32
    %c0_i32 = arith.constant 0 : i32
    %c0_i32_0 = arith.constant 0 : i32
    %c0_i32_1 = arith.constant 0 : i32
    return %arg0, %2, %c0_i32, %c0_i32_0 : i32, i32, i32, i32
  }
  func.func @transform_3(%arg0: i32, %arg1: i32) -> (i32, i32, i32) {
    %c0_i32 = arith.constant 0 : i32
    %c0_i32_0 = arith.constant 0 : i32
    %c0_i32_1 = arith.constant 0 : i32
    %c0_i32_2 = arith.constant 0 : i32
    return %c0_i32, %c0_i32_0, %c0_i32_1 : i32, i32, i32
  }
  func.func @transform_4(%arg0: i32, %arg1: i32) -> (i32, i32) {
    %c0_i32 = arith.constant 0 : i32
    %c0_i32_0 = arith.constant 0 : i32
    %c0_i32_1 = arith.constant 0 : i32
    return %c0_i32, %c0_i32_0 : i32, i32
  }
  func.func @transform_5(%arg0: i32, %arg1: i32) -> (i32, i32) {
    %c0_i32 = arith.constant 0 : i32
    %c0_i32_0 = arith.constant 0 : i32
    %c0_i32_1 = arith.constant 0 : i32
    return %c0_i32, %c0_i32_0 : i32, i32
  }
  func.func @transform_6(%arg0: i32, %arg1: i32) -> (i32, i32, i32) {
    %c0_i32 = arith.constant 0 : i32
    %c0_i32_0 = arith.constant 0 : i32
    %c0_i32_1 = arith.constant 0 : i32
    %c0_i32_2 = arith.constant 0 : i32
    return %c0_i32, %c0_i32_0, %c0_i32_1 : i32, i32, i32
  }
  func.func @transform_7(%arg0: i32, %arg1: i32) -> (i32, i32) {
    %c0_i32 = arith.constant 0 : i32
    %c0_i32_0 = arith.constant 0 : i32
    %c0_i32_1 = arith.constant 0 : i32
    return %c0_i32, %c0_i32_0 : i32, i32
  }
  func.func @transform_8(%arg0: i32, %arg1: i32) -> (i32, i32) {
    %c0_i32 = arith.constant 0 : i32
    %c0_i32_0 = arith.constant 0 : i32
    %c0_i32_1 = arith.constant 0 : i32
    return %c0_i32, %c0_i32_0 : i32, i32
  }
  func.func @transform_9(%arg0: i32, %arg1: i32) -> (i32, i32, i32, i32) {
    %c0_i32 = arith.constant 0 : i32
    %c0_i32_0 = arith.constant 0 : i32
    %c0_i32_1 = arith.constant 0 : i32
    return %arg0, %arg1, %c0_i32, %c0_i32_0 : i32, i32, i32, i32
  }
}

</mosaic_0001>

<llo_original>
// kernel: down_forward.1
$region0: #{down_forward.1}
  #allocation0 [shape = 'u32[]', space=smem, size = 0x4, offset = 0x4, fixed_abs, tag = 'smem constant byte address 0x4 - core index']
  #allocation1 [shape = 'u32[144,128]{1,0:T(1,128)}', space=vmem, size = 0x12000, scoped, tag = 'internal scratch']
  #allocation2 [shape = 'bf16[8,10,4]{2,1,0:T(8,128)(2,1)}', space=vmem, size = 0x8000, scoped, tag = 'scratch operand']
  #allocation3 [shape = 'bf16[6,10,8]{2,1,0:T(8,128)(2,1)}', space=vmem, size = 0x6000, scoped, tag = 'scratch operand']
  %s0 = inlined_call_operand.vmem [shape: bf16[2,16,8,8], index: 0, kind: input, shape index: {}, may-alias: {0,1,2}]
  %s1 = inlined_call_operand.vmem [shape: bf16[2,16,8,8], index: 1, kind: input, shape index: {}, may-alias: {0,1,2}]
  %s2 = inlined_call_operand.vmem [shape: bf16[2,16,8,8], index: 2, kind: input, shape index: {}, may-alias: {0,1,2}]
  %s3 = inlined_call_operand.vmem [shape: bf16[3,12,8], index: 3, kind: input, shape index: {}]
  %s4 = inlined_call_operand.vmem [shape: f32[1,8], index: 4, kind: input, shape index: {}]
  %s5 = inlined_call_operand.vmem [shape: f32[1,8], index: 5, kind: input, shape index: {}]
  %s6 = inlined_call_operand.vmem [shape: bf16[3,24,8], index: 6, kind: input, shape index: {}]
  %s7 = inlined_call_operand.vmem [shape: f32[1,8], index: 7, kind: input, shape index: {}]
  %s8 = inlined_call_operand.vmem [shape: f32[1,8], index: 8, kind: input, shape index: {}]
  %s9 = inlined_call_operand.vmem [shape: f32[2,8,8,8], index: 9, kind: output, shape index: {}]
  %s10 = sld [smem:[#allocation0]]
  $region77: #{down_forward.1} parent=0
    _
  %s12 = ssub.s32 1, %s10
  %s13 = scalar_select 0, %s12, %s10
  loop: start=0, step=1, limit=6
  $region2: #{down_forward.1} parent=0 // loop_pre_header
    _
  $region3: #{down_forward.1} parent=0 // loop_header
    %s15 = sphi 0, %s19
    %p16 = scmp.ge.s32.totalorder %s15, 6
    %s22 = sphi 0, %s34
    %s23 = sphi 0, %s30
    %s24 = sphi 0, %s22
    %s25 = sphi 0, %s23
    %s26 = sphi 0, %s24
    %s27 = sphi 0, %s25
    %s39 = sphi 0, %s41
    %s42 = sphi 0, %s39
    %s43 = sphi 0, %s42
    %s59 = sphi 0, %s43
    %s75 = sphi 0, %s77
    %s78 = sphi 0, %s75
    %s79 = sphi 0, %s78
    %s95 = sphi 0, %s79
    %s111 = sphi 0, %s113
    %s114 = sphi 0, %s111
    %s115 = sphi 0, %s114
    %s131 = sphi 0, %s115
    %s135 = sphi 0, %s135
    %s137 = sphi 0, %s135
    %s138 = sphi 0, %s137
    %s152 = sphi 0, %s138
    %s156 = sphi 0, %s156
    %s158 = sphi 0, %s156
    %s159 = sphi 0, %s158
    %s173 = sphi 0, %s159
    %s177 = sphi 0, %s177
    %s179 = sphi 0, %s177
    %s180 = sphi 0, %s179
    %s194 = sphi 0, %s180
    %s198 = sphi 0, %s198
    %s200 = sphi 0, %s198
    %s201 = sphi 0, %s200
    %s215 = sphi 0, %s201
    %s219 = sphi 0, %s219
    %s221 = sphi 0, %s219
    %s222 = sphi 0, %s221
    %s236 = sphi 0, %s222
    %s240 = sphi 0, %s240
    %s242 = sphi 0, %s240
    %s243 = sphi 0, %s242
    %s257 = sphi 0, %s243
    %s265 = sphi 0, %s267
    %s268 = sphi 0, %s265
    %s269 = sphi 0, %s268
    %s285 = sphi 0, %s269
  $region4: #{down_forward.1} parent=0 // loop_header_branch
    %18 = sbr.rel (%p16) target = $region8
  $region5: #{down_forward.1} parent=0 // loop_body
    %s20 = ssub.s32 %s15, 1
    %s21 = ssub.s32 %s15, 2
    %s28 = sadd.s32 1, %s23
    %p29 = scmp.ge.s32.totalorder %s28, 2
    %s30 = scalar_select %p29, 0, %s28
    %s31 = sadd.s32 1, %s22
    %s32 = scalar_select %p29, %s31, %s22
    %p33 = scmp.ge.s32.totalorder %s32, 2
    %s34 = scalar_select %p33, 0, %s32
    %s35 = ssub.s32 %s22, %s34
    %s36 = ssub.s32 %s23, %s30
    %s37 = sor.u32 %s35, %s36
    %p38 = scmp.eq.s32.totalorder %s37, 0
    %s40 = sadd.s32 %s39, 1
    %s41 = scalar_select %p38, %s39, %s40
    %p44 = pneg %p38
    %p45 = scmp.eq.s32.totalorder %s15, 3
    %p46 = por %p44, %p45
    %p47 = scmp.ne.s32.totalorder %s39, %s42
    %p48 = scmp.eq.s32.totalorder %s15, 0
    %p49 = por %p47, %p48
    %p50 = scmp.ne.s32.totalorder %s39, %s42
    %p51 = scmp.eq.s32.totalorder %s20, 3
    %p52 = por %p50, %p51
    %p53 = scmp.ne.s32.totalorder %s42, %s43
    %p54 = scmp.eq.s32.totalorder %s20, 0
    %p55 = por %p53, %p54
    %p56 = scmp.ne.s32.totalorder %s42, %s43
    %p57 = scmp.eq.s32.totalorder %s21, 3
    %p58 = por %p56, %p57
    %p60 = scmp.ne.s32.totalorder %s43, %s59
    %p61 = scmp.eq.s32.totalorder %s21, 0
    %p62 = por %p60, %p61
    %s63 = smul.u32 %s23, 2
    %s64 = ssub.s32 %s63, 1
    %p65 = scmp.gt.s32.totalorder %s64, 0
    %s66 = scalar_select %p65, %s64, 0
    %s67 = smul.u32 %s30, 2
    %s68 = ssub.s32 %s67, 1
    %p69 = scmp.gt.s32.totalorder %s68, 0
    %s70 = scalar_select %p69, %s68, 0
    %s71 = ssub.s32 %s22, %s34
    %s72 = ssub.s32 %s66, %s70
    %s73 = sor.u32 %s71, %s72
    %p74 = scmp.eq.s32.totalorder %s73, 0
    %s76 = sadd.s32 %s75, 1
    %s77 = scalar_select %p74, %s75, %s76
    %p80 = pneg %p74
    %p81 = scmp.eq.s32.totalorder %s15, 3
    %p82 = por %p80, %p81
    %p83 = scmp.ne.s32.totalorder %s75, %s78
    %p84 = scmp.eq.s32.totalorder %s15, 0
    %p85 = por %p83, %p84
    %p86 = scmp.ne.s32.totalorder %s75, %s78
    %p87 = scmp.eq.s32.totalorder %s20, 3
    %p88 = por %p86, %p87
    %p89 = scmp.ne.s32.totalorder %s78, %s79
    %p90 = scmp.eq.s32.totalorder %s20, 0
    %p91 = por %p89, %p90
    %p92 = scmp.ne.s32.totalorder %s78, %s79
    %p93 = scmp.eq.s32.totalorder %s21, 3
    %p94 = por %p92, %p93
    %p96 = scmp.ne.s32.totalorder %s79, %s95
    %p97 = scmp.eq.s32.totalorder %s21, 0
    %p98 = por %p96, %p97
    %s99 = sadd.s32 %s23, 1
    %s100 = smul.u32 %s99, 2
    %p101 = scmp.lt.s32.totalorder %s100, 3
    %s102 = scalar_select %p101, %s100, 3
    %s103 = sadd.s32 %s30, 1
    %s104 = smul.u32 %s103, 2
    %p105 = scmp.lt.s32.totalorder %s104, 3
    %s106 = scalar_select %p105, %s104, 3
    %s107 = ssub.s32 %s22, %s34
    %s108 = ssub.s32 %s102, %s106
    %s109 = sor.u32 %s107, %s108
    %p110 = scmp.eq.s32.totalorder %s109, 0
    %s112 = sadd.s32 %s111, 1
    %s113 = scalar_select %p110, %s111, %s112
    %p116 = pneg %p110
    %p117 = scmp.eq.s32.totalorder %s15, 3
    %p118 = por %p116, %p117
    %p119 = scmp.ne.s32.totalorder %s111, %s114
    %p120 = scmp.eq.s32.totalorder %s15, 0
    %p121 = por %p119, %p120
    %p122 = scmp.ne.s32.totalorder %s111, %s114
    %p123 = scmp.eq.s32.totalorder %s20, 3
    %p124 = por %p122, %p123
    %p125 = scmp.ne.s32.totalorder %s114, %s115
    %p126 = scmp.eq.s32.totalorder %s20, 0
    %p127 = por %p125, %p126
    %p128 = scmp.ne.s32.totalorder %s114, %s115
    %p129 = scmp.eq.s32.totalorder %s21, 3
    %p130 = por %p128, %p129
    %p132 = scmp.ne.s32.totalorder %s115, %s131
    %p133 = scmp.eq.s32.totalorder %s21, 0
    %p134 = por %p132, %p133
    %s136 = sadd.s32 %s135, 1
    %p139 = scmp.eq.s32.totalorder %s15, 3
    %p140 = scmp.ne.s32.totalorder %s135, %s137
    %p141 = scmp.eq.s32.totalorder %s15, 0
    %p142 = por %p140, %p141
    %p143 = scmp.ne.s32.totalorder %s135, %s137
    %p144 = scmp.eq.s32.totalorder %s20, 3
    %p145 = por %p143, %p144
    %p146 = scmp.ne.s32.totalorder %s137, %s138
    %p147 = scmp.eq.s32.totalorder %s20, 0
    %p148 = por %p146, %p147
    %p149 = scmp.ne.s32.totalorder %s137, %s138
    %p150 = scmp.eq.s32.totalorder %s21, 3
    %p151 = por %p149, %p150
    %p153 = scmp.ne.s32.totalorder %s138, %s152
    %p154 = scmp.eq.s32.totalorder %s21, 0
    %p155 = por %p153, %p154
    %s157 = sadd.s32 %s156, 1
    %p160 = scmp.eq.s32.totalorder %s15, 3
    %p161 = scmp.ne.s32.totalorder %s156, %s158
    %p162 = scmp.eq.s32.totalorder %s15, 0
    %p163 = por %p161, %p162
    %p164 = scmp.ne.s32.totalorder %s156, %s158
    %p165 = scmp.eq.s32.totalorder %s20, 3
    %p166 = por %p164, %p165
    %p167 = scmp.ne.s32.totalorder %s158, %s159
    %p168 = scmp.eq.s32.totalorder %s20, 0
    %p169 = por %p167, %p168
    %p170 = scmp.ne.s32.totalorder %s158, %s159
    %p171 = scmp.eq.s32.totalorder %s21, 3
    %p172 = por %p170, %p171
    %p174 = scmp.ne.s32.totalorder %s159, %s173
    %p175 = scmp.eq.s32.totalorder %s21, 0
    %p176 = por %p174, %p175
    %s178 = sadd.s32 %s177, 1
    %p181 = scmp.eq.s32.totalorder %s15, 3
    %p182 = scmp.ne.s32.totalorder %s177, %s179
    %p183 = scmp.eq.s32.totalorder %s15, 0
    %p184 = por %p182, %p183
    %p185 = scmp.ne.s32.totalorder %s177, %s179
    %p186 = scmp.eq.s32.totalorder %s20, 3
    %p187 = por %p185, %p186
    %p188 = scmp.ne.s32.totalorder %s179, %s180
    %p189 = scmp.eq.s32.totalorder %s20, 0
    %p190 = por %p188, %p189
    %p191 = scmp.ne.s32.totalorder %s179, %s180
    %p192 = scmp.eq.s32.totalorder %s21, 3
    %p193 = por %p191, %p192
    %p195 = scmp.ne.s32.totalorder %s180, %s194
    %p196 = scmp.eq.s32.totalorder %s21, 0
    %p197 = por %p195, %p196
    %s199 = sadd.s32 %s198, 1
    %p202 = scmp.eq.s32.totalorder %s15, 3
    %p203 = scmp.ne.s32.totalorder %s198, %s200
    %p204 = scmp.eq.s32.totalorder %s15, 0
    %p205 = por %p203, %p204
    %p206 = scmp.ne.s32.totalorder %s198, %s200
    %p207 = scmp.eq.s32.totalorder %s20, 3
    %p208 = por %p206, %p207
    %p209 = scmp.ne.s32.totalorder %s200, %s201
    %p210 = scmp.eq.s32.totalorder %s20, 0
    %p211 = por %p209, %p210
    %p212 = scmp.ne.s32.totalorder %s200, %s201
    %p213 = scmp.eq.s32.totalorder %s21, 3
    %p214 = por %p212, %p213
    %p216 = scmp.ne.s32.totalorder %s201, %s215
    %p217 = scmp.eq.s32.totalorder %s21, 0
    %p218 = por %p216, %p217
    %s220 = sadd.s32 %s219, 1
    %p223 = scmp.eq.s32.totalorder %s15, 3
    %p224 = scmp.ne.s32.totalorder %s219, %s221
    %p225 = scmp.eq.s32.totalorder %s15, 0
    %p226 = por %p224, %p225
    %p227 = scmp.ne.s32.totalorder %s219, %s221
    %p228 = scmp.eq.s32.totalorder %s20, 3
    %p229 = por %p227, %p228
    %p230 = scmp.ne.s32.totalorder %s221, %s222
    %p231 = scmp.eq.s32.totalorder %s20, 0
    %p232 = por %p230, %p231
    %p233 = scmp.ne.s32.totalorder %s221, %s222
    %p234 = scmp.eq.s32.totalorder %s21, 3
    %p235 = por %p233, %p234
    %p237 = scmp.ne.s32.totalorder %s222, %s236
    %p238 = scmp.eq.s32.totalorder %s21, 0
    %p239 = por %p237, %p238
    %s241 = sadd.s32 %s240, 1
    %p244 = scmp.eq.s32.totalorder %s15, 3
    %p245 = scmp.ne.s32.totalorder %s240, %s242
    %p246 = scmp.eq.s32.totalorder %s15, 0
    %p247 = por %p245, %p246
    %p248 = scmp.ne.s32.totalorder %s240, %s242
    %p249 = scmp.eq.s32.totalorder %s20, 3
    %p250 = por %p248, %p249
    %p251 = scmp.ne.s32.totalorder %s242, %s243
    %p252 = scmp.eq.s32.totalorder %s20, 0
    %p253 = por %p251, %p252
    %p254 = scmp.ne.s32.totalorder %s242, %s243
    %p255 = scmp.eq.s32.totalorder %s21, 3
    %p256 = por %p254, %p255
    %p258 = scmp.ne.s32.totalorder %s243, %s257
    %p259 = scmp.eq.s32.totalorder %s21, 0
    %p260 = por %p258, %p259
    %s261 = ssub.s32 %s22, %s34
    %s262 = ssub.s32 %s23, %s30
    %s263 = sor.u32 %s261, %s262
    %p264 = scmp.eq.s32.totalorder %s263, 0
    %s266 = sadd.s32 %s265, 1
    %s267 = scalar_select %p264, %s265, %s266
    %p270 = pneg %p264
    %p271 = scmp.eq.s32.totalorder %s15, 3
    %p272 = por %p270, %p271
    %p273 = scmp.ne.s32.totalorder %s265, %s268
    %p274 = scmp.eq.s32.totalorder %s15, 0
    %p275 = por %p273, %p274
    %p276 = scmp.ne.s32.totalorder %s265, %s268
    %p277 = scmp.eq.s32.totalorder %s20, 3
    %p278 = por %p276, %p277
    %p279 = scmp.ne.s32.totalorder %s268, %s269
    %p280 = scmp.eq.s32.totalorder %s20, 0
    %p281 = por %p279, %p280
    %p282 = scmp.ne.s32.totalorder %s268, %s269
    %p283 = scmp.eq.s32.totalorder %s21, 3
    %p284 = por %p282, %p283
    %p286 = scmp.ne.s32.totalorder %s269, %s285
    %p287 = scmp.eq.s32.totalorder %s21, 0
    %p288 = por %p286, %p287
    %p289 = scmp.le.s32.totalorder 1, %s15
    %p290 = scmp.lt.s32.totalorder %s15, 5
    %p291 = pnand %p289, %p290
    %p292 = pneg %p291
    // Predicated region
    $region9: #{down_forward.1} parent=5 // pred_check
      _
    $region10: #{down_forward.1} parent=5 // pred_check_branch
      %294 = sbr.rel (%p291) target = $region12
    $region11: #{down_forward.1} parent=5 // pred_region
      %s295 = ssub.s32 %s15, 1
      // Predicated region
      $region13: #{down_forward.1} parent=11 // pred_check
        %p296 = pneg %p148
      $region14: #{down_forward.1} parent=11 // pred_check_branch
        %298 = sbr.rel (%p296) target = $region16
      $region15: #{down_forward.1} parent=11 // pred_region
        _
      $region16: #{down_forward.1} parent=11 // pred_fallthru
        _
      // Predicated region
      $region17: #{down_forward.1} parent=11 // pred_check
        %p299 = pneg %p169
      $region18: #{down_forward.1} parent=11 // pred_check_branch
        %301 = sbr.rel (%p299) target = $region20
      $region19: #{down_forward.1} parent=11 // pred_region
        _
      $region20: #{down_forward.1} parent=11 // pred_fallthru
        _
      // Predicated region
      $region21: #{down_forward.1} parent=11 // pred_check
        %p302 = pneg %p190
      $region22: #{down_forward.1} parent=11 // pred_check_branch
        %304 = sbr.rel (%p302) target = $region24
      $region23: #{down_forward.1} parent=11 // pred_region
        _
      $region24: #{down_forward.1} parent=11 // pred_fallthru
        _
      // Predicated region
      $region25: #{down_forward.1} parent=11 // pred_check
        %p305 = pneg %p211
      $region26: #{down_forward.1} parent=11 // pred_check_branch
        %307 = sbr.rel (%p305) target = $region28
      $region27: #{down_forward.1} parent=11 // pred_region
        _
      $region28: #{down_forward.1} parent=11 // pred_fallthru
        _
      // Predicated region
      $region29: #{down_forward.1} parent=11 // pred_check
        %p308 = pneg %p232
      $region30: #{down_forward.1} parent=11 // pred_check_branch
        %310 = sbr.rel (%p308) target = $region32
      $region31: #{down_forward.1} parent=11 // pred_region
        _
      $region32: #{down_forward.1} parent=11 // pred_fallthru
        _
      // Predicated region
      $region33: #{down_forward.1} parent=11 // pred_check
        %p311 = pneg %p253
      $region34: #{down_forward.1} parent=11 // pred_check_branch
        %313 = sbr.rel (%p311) target = $region36
      $region35: #{down_forward.1} parent=11 // pred_region
        _
      $region36: #{down_forward.1} parent=11 // pred_fallthru
        _
    $region12: #{down_forward.1} parent=5 // pred_fallthru
      _
    %p314 = scmp.lt.s32.totalorder %s15, 4
    // Predicated region
    $region37: #{down_forward.1} parent=5 // pred_check
      %p315 = pneg %p314
    $region38: #{down_forward.1} parent=5 // pred_check_branch
      %317 = sbr.rel (%p315) target = $region40
    $region39: #{down_forward.1} parent=5 // pred_region
      // Predicated region
      $region41: #{down_forward.1} parent=39 // pred_check
        %p318 = pneg %p49
      $region42: #{down_forward.1} parent=39 // pred_check_branch
        %320 = sbr.rel (%p318) target = $region44
      $region43: #{down_forward.1} parent=39 // pred_region
        %s321 = smul.u32 8, %s23
        %p322 = scmp.lt.s32.totalorder %s22, 1
        %s323 = scalar_select %p322, %s22, 1
        %p324 = scmp.lt.s32.totalorder %s321, 15
        %s325 = scalar_select %p324, %s321, 15
        %s326 = smul.addr %s323, 16
        %s327 = sadd.s32 %s325, %s326
        %s328 = smul.addr %s327, 4
        %s329 = scalar_lea.vmem %s0, %s328
        %s330 = smul.u32 8, %s23
      $region44: #{down_forward.1} parent=39 // pred_fallthru
        _
      // Predicated region
      $region45: #{down_forward.1} parent=39 // pred_check
        %p331 = pneg %p85
      $region46: #{down_forward.1} parent=39 // pred_check_branch
        %333 = sbr.rel (%p331) target = $region48
      $region47: #{down_forward.1} parent=39 // pred_region
        %s334 = smul.u32 %s23, 2
        %s335 = ssub.s32 %s334, 1
        %p336 = scmp.gt.s32.totalorder %s335, 0
        %s337 = scalar_select %p336, %s335, 0
        %s338 = smul.u32 4, %s337
        %p339 = scmp.lt.s32.totalorder %s22, 1
        %s340 = scalar_select %p339, %s22, 1
        %p341 = scmp.lt.s32.totalorder %s338, 15
        %s342 = scalar_select %p341, %s338, 15
        %s343 = smul.addr %s340, 16
        %s344 = sadd.s32 %s342, %s343
        %s345 = smul.addr %s344, 4
        %s346 = scalar_lea.vmem %s1, %s345
        %s347 = smul.u32 %s23, 2
        %s348 = ssub.s32 %s347, 1
        %p349 = scmp.gt.s32.totalorder %s348, 0
        %s350 = scalar_select %p349, %s348, 0
        %s351 = smul.u32 4, %s350
      $region48: #{down_forward.1} parent=39 // pred_fallthru
        _
      // Predicated region
      $region49: #{down_forward.1} parent=39 // pred_check
        %p352 = pneg %p121
      $region50: #{down_forward.1} parent=39 // pred_check_branch
        %354 = sbr.rel (%p352) target = $region52
      $region51: #{down_forward.1} parent=39 // pred_region
        %s355 = sadd.s32 %s23, 1
        %s356 = smul.u32 %s355, 2
        %p357 = scmp.lt.s32.totalorder %s356, 3
        %s358 = scalar_select %p357, %s356, 3
        %s359 = smul.u32 4, %s358
        %p360 = scmp.lt.s32.totalorder %s22, 1
        %s361 = scalar_select %p360, %s22, 1
        %p362 = scmp.lt.s32.totalorder %s359, 15
        %s363 = scalar_select %p362, %s359, 15
        %s364 = smul.addr %s361, 16
        %s365 = sadd.s32 %s363, %s364
        %s366 = smul.addr %s365, 4
        %s367 = scalar_lea.vmem %s2, %s366
        %s368 = sadd.s32 %s23, 1
        %s369 = smul.u32 %s368, 2
        %p370 = scmp.lt.s32.totalorder %s369, 3
        %s371 = scalar_select %p370, %s369, 3
        %s372 = smul.u32 4, %s371
      $region52: #{down_forward.1} parent=39 // pred_fallthru
        _
    $region40: #{down_forward.1} parent=5 // pred_fallthru
      _
    %p373 = scmp.le.s32.totalorder 1, %s15
    %p374 = scmp.lt.s32.totalorder %s15, 5
    %p375 = pnand %p373, %p374
    %p376 = pneg %p375
    // Predicated region
    $region53: #{down_forward.1} parent=5 // pred_check
      _
    $region54: #{down_forward.1} parent=5 // pred_check_branch
      %378 = sbr.rel (%p375) target = $region56
    $region55: #{down_forward.1} parent=5 // pred_region
      %s379 = ssub.s32 %s15, 1
      %s380 = smul.u32 8, %s25
      %p381 = scmp.lt.s32.totalorder %s24, 1
      %s382 = scalar_select %p381, %s24, 1
      %p383 = scmp.lt.s32.totalorder %s380, 15
      %s384 = scalar_select %p383, %s380, 15
      %s385 = smul.addr %s382, 16
      %s386 = sadd.s32 %s384, %s385
      %s387 = smul.addr %s386, 4
      %s388 = scalar_lea.vmem %s0, %s387
      %p389 = pneg %p55
      %p390 = pneg %p52
      %s391 = smul.u32 %s25, 2
      %s392 = ssub.s32 %s391, 1
      %p393 = scmp.gt.s32.totalorder %s392, 0
      %s394 = scalar_select %p393, %s392, 0
      %s395 = smul.u32 4, %s394
      %p396 = scmp.lt.s32.totalorder %s24, 1
      %s397 = scalar_select %p396, %s24, 1
      %p398 = scmp.lt.s32.totalorder %s395, 15
      %s399 = scalar_select %p398, %s395, 15
      %s400 = smul.addr %s397, 16
      %s401 = sadd.s32 %s399, %s400
      %s402 = smul.addr %s401, 4
      %s403 = scalar_lea.vmem %s1, %s402
      %p404 = pneg %p91
      %p405 = pneg %p88
      %s406 = sadd.s32 %s25, 1
      %s407 = smul.u32 %s406, 2
      %p408 = scmp.lt.s32.totalorder %s407, 3
      %s409 = scalar_select %p408, %s407, 3
      %s410 = smul.u32 4, %s409
      %p411 = scmp.lt.s32.totalorder %s24, 1
      %s412 = scalar_select %p411, %s24, 1
      %p413 = scmp.lt.s32.totalorder %s410, 15
      %s414 = scalar_select %p413, %s410, 15
      %s415 = smul.addr %s412, 16
      %s416 = sadd.s32 %s414, %s415
      %s417 = smul.addr %s416, 4
      %s418 = scalar_lea.vmem %s2, %s417
      %p419 = pneg %p127
      %p420 = pneg %p124
      %p421 = pneg %p148
      %p422 = pneg %p145
      %p423 = pneg %p169
      %p424 = pneg %p166
      %p425 = pneg %p190
      %p426 = pneg %p187
      %p427 = pneg %p211
      %p428 = pneg %p208
      %p429 = pneg %p232
      %p430 = pneg %p229
      %p431 = pneg %p253
      %p432 = pneg %p250
      %p433 = pneg %p281
      %p434 = pneg %p278
      %s435 = smul.u32 4, %s25
      %p436 = scmp.lt.s32.totalorder %s24, 1
      %s437 = scalar_select %p436, %s24, 1
      %p438 = scmp.lt.s32.totalorder %s435, 7
      %s439 = scalar_select %p438, %s435, 7
      %s440 = smul.addr %s437, 8
      %s441 = sadd.s32 %s439, %s440
      %s442 = smul.addr %s441, 8
      %s443 = scalar_lea.vmem %s9, %s442
      %s444 = smul.u32 8, %s25
      %p445 = scmp.lt.s32.totalorder %s24, 1
      %s446 = scalar_select %p445, %s24, 1
      %p447 = scmp.lt.s32.totalorder %s444, 15
      %s448 = scalar_select %p447, %s444, 15
      %s449 = smul.addr %s446, 16
      %s450 = sadd.s32 %s448, %s449
      %s451 = smul.addr %s450, 4
      %s452 = scalar_lea.vmem %s0, %s451
      %s453 = smul.u32 8, %s25
      %s454 = smul.u32 %s25, 2
      %s455 = ssub.s32 %s454, 1
      %p456 = scmp.gt.s32.totalorder %s455, 0
      %s457 = scalar_select %p456, %s455, 0
      %s458 = smul.u32 4, %s457
      %p459 = scmp.lt.s32.totalorder %s24, 1
      %s460 = scalar_select %p459, %s24, 1
      %p461 = scmp.lt.s32.totalorder %s458, 15
      %s462 = scalar_select %p461, %s458, 15
      %s463 = smul.addr %s460, 16
      %s464 = sadd.s32 %s462, %s463
      %s465 = smul.addr %s464, 4
      %s466 = scalar_lea.vmem %s1, %s465
      %s467 = smul.u32 %s25, 2
      %s468 = ssub.s32 %s467, 1
      %p469 = scmp.gt.s32.totalorder %s468, 0
      %s470 = scalar_select %p469, %s468, 0
      %s471 = smul.u32 4, %s470
      %s472 = sadd.s32 %s25, 1
      %s473 = smul.u32 %s472, 2
      %p474 = scmp.lt.s32.totalorder %s473, 3
      %s475 = scalar_select %p474, %s473, 3
      %s476 = smul.u32 4, %s475
      %p477 = scmp.lt.s32.totalorder %s24, 1
      %s478 = scalar_select %p477, %s24, 1
      %p479 = scmp.lt.s32.totalorder %s476, 15
      %s480 = scalar_select %p479, %s476, 15
      %s481 = smul.addr %s478, 16
      %s482 = sadd.s32 %s480, %s481
      %s483 = smul.addr %s482, 4
      %s484 = scalar_lea.vmem %s2, %s483
      %s485 = sadd.s32 %s25, 1
      %s486 = smul.u32 %s485, 2
      %p487 = scmp.lt.s32.totalorder %s486, 3
      %s488 = scalar_select %p487, %s486, 3
      %s489 = smul.u32 4, %s488
      %s490 = smul.u32 4, %s25
      %p491 = scmp.lt.s32.totalorder %s24, 1
      %s492 = scalar_select %p491, %s24, 1
      %p493 = scmp.lt.s32.totalorder %s490, 7
      %s494 = scalar_select %p493, %s490, 7
      %s495 = smul.addr %s492, 8
      %s496 = sadd.s32 %s494, %s495
      %s497 = smul.addr %s496, 8
      %s498 = scalar_lea.vmem %s9, %s497
      %s499 = smul.u32 4, %s25
      %v501 = vld [vmem:[%s452] sm:$0xf]
      %v502 = vld [vmem:[%s452 + $0x4] sm:$0xf]
      %v503 = vld [vmem:[%s452 + $0x8] sm:$0xf]
      %v504 = vld [vmem:[%s452 + $0xc] sm:$0xf]
      %v505 = vld [vmem:[%s452 + $0x10] sm:$0xf]
      %v506 = vld [vmem:[%s452 + $0x14] sm:$0xf]
      %v507 = vld [vmem:[%s452 + $0x18] sm:$0xf]
      %v508 = vld [vmem:[%s452 + $0x1c] sm:$0xf]
      %v509 = vmax.bf16 %v501, %v502
      %v510 = vmax.bf16 %v503, %v504
      %v511 = vmax.bf16 %v505, %v506
      %v512 = vmax.bf16 %v507, %v508
      %517 = vrot.lane.b32.xlu0 %v509, 124
      %v518 = vpop.permute.xlu0 %517
      %519 = vrot.lane.b32.xlu0 %v510, 124
      %v520 = vpop.permute.xlu0 %519
      %521 = vrot.lane.b32.xlu0 %v511, 124
      %v522 = vpop.permute.xlu0 %521
      %523 = vrot.lane.b32.xlu0 %v512, 124
      %v524 = vpop.permute.xlu0 %523
      %v529 = vmax.bf16 %v509, %v518
      %v530 = vmax.bf16 %v510, %v520
      %v531 = vmax.bf16 %v511, %v522
      %v532 = vmax.bf16 %v512, %v524
      %v533 = vld [vmem:[%s466] sm:$0xf]
      %v534 = vld [vmem:[%s466 + $0x4] sm:$0xf]
      %v535 = vld [vmem:[%s466 + $0x8] sm:$0xf]
      %v536 = vld [vmem:[%s466 + $0xc] sm:$0xf]
      %v537 = vmax.bf16 %v533, %v534
      %v538 = vmax.bf16 %v535, %v536
      %541 = vrot.lane.b32.xlu0 %v537, 124
      %v542 = vpop.permute.xlu0 %541
      %543 = vrot.lane.b32.xlu0 %v538, 124
      %v544 = vpop.permute.xlu0 %543
      %v547 = vmax.bf16 %v537, %v542
      %v548 = vmax.bf16 %v538, %v544
      %v549 = vld [vmem:[%s484] sm:$0xf]
      %v550 = vld [vmem:[%s484 + $0x4] sm:$0xf]
      %v551 = vld [vmem:[%s484 + $0x8] sm:$0xf]
      %v552 = vld [vmem:[%s484 + $0xc] sm:$0xf]
      %v553 = vmax.bf16 %v549, %v550
      %v554 = vmax.bf16 %v551, %v552
      %557 = vrot.lane.b32.xlu0 %v553, 124
      %v558 = vpop.permute.xlu0 %557
      %559 = vrot.lane.b32.xlu0 %v554, 124
      %v560 = vpop.permute.xlu0 %559
      %v563 = vmax.bf16 %v553, %v558
      %v564 = vmax.bf16 %v554, %v560
      %p565 = scmp.gt.s32.totalorder %s25, 0
      %s566 = scalar_select %p565, 1, 0
      %v567 = vstv %s566
      %vm568 = vcmp.eq.s32.totalorder %v567, 1
      %v569 = vsel %vm568, %v547, 0
      %v570 = vsel %vm568, %v548, 0
      %p571 = scmp.lt.s32.totalorder %s25, 1
      %s572 = scalar_select %p571, 1, 0
      %v573 = vstv %s572
      %vm574 = vcmp.eq.s32.totalorder %v573, 1
      %v575 = vsel %vm574, %v563, 0
      %v576 = vsel %vm574, %v564, 0
      %vm577 = vcmask 24576
      %vm578 = vsmask.f32 256
      %vm579 = vmand %vm577, %vm578
      %v580 = vld [vmem:[#allocation2] sm:$0x1]
      %v581 = vsel %vm579, 0, %v580
      %582 = vst [vmem:[#allocation2] sm:$0x1] %v581
      %v583 = vld [vmem:[#allocation2 + $0x8] sm:$0x1]
      %v584 = vsel %vm579, 0, %v583
      %585 = vst [vmem:[#allocation2 + $0x8] sm:$0x1] %v584
      %v586 = vld [vmem:[#allocation2 + $0x10] sm:$0x1]
      %v587 = vsel %vm579, 0, %v586
      %588 = vst [vmem:[#allocation2 + $0x10] sm:$0x1] %v587
      %v589 = vld [vmem:[#allocation2 + $0x18] sm:$0x1]
      %v590 = vsel %vm579, 0, %v589
      %591 = vst [vmem:[#allocation2 + $0x18] sm:$0x1] %v590
      %v592 = vld [vmem:[#allocation2 + $0x20] sm:$0x1]
      %v593 = vsel %vm579, 0, %v592
      %594 = vst [vmem:[#allocation2 + $0x20] sm:$0x1] %v593
      %v595 = vld [vmem:[#allocation2 + $0x28] sm:$0x1]
      %v596 = vsel %vm579, 0, %v595
      %597 = vst [vmem:[#allocation2 + $0x28] sm:$0x1] %v596
      %v598 = vld [vmem:[#allocation2 + $0x30] sm:$0x1]
      %v599 = vsel %vm579, 0, %v598
      %600 = vst [vmem:[#allocation2 + $0x30] sm:$0x1] %v599
      %v601 = vld [vmem:[#allocation2 + $0x38] sm:$0x1]
      %v602 = vsel %vm579, 0, %v601
      %603 = vst [vmem:[#allocation2 + $0x38] sm:$0x1] %v602
      %vm604 = vsmask.f32 7938
      %vm605 = vmand %vm577, %vm604
      %v606 = vld [vmem:[#allocation2 + $0x4] sm:$0x1]
      %v607 = vsel %vm605, 0, %v606
      %608 = vst [vmem:[#allocation2 + $0x4] sm:$0x1] %v607
      %v609 = vld [vmem:[#allocation2 + $0xc] sm:$0x1]
      %v610 = vsel %vm605, 0, %v609
      %611 = vst [vmem:[#allocation2 + $0xc] sm:$0x1] %v610
      %v612 = vld [vmem:[#allocation2 + $0x14] sm:$0x1]
      %v613 = vsel %vm605, 0, %v612
      %614 = vst [vmem:[#allocation2 + $0x14] sm:$0x1] %v613
      %v615 = vld [vmem:[#allocation2 + $0x1c] sm:$0x1]
      %v616 = vsel %vm605, 0, %v615
      %617 = vst [vmem:[#allocation2 + $0x1c] sm:$0x1] %v616
      %v618 = vld [vmem:[#allocation2 + $0x24] sm:$0x1]
      %v619 = vsel %vm605, 0, %v618
      %620 = vst [vmem:[#allocation2 + $0x24] sm:$0x1] %v619
      %v621 = vld [vmem:[#allocation2 + $0x2c] sm:$0x1]
      %v622 = vsel %vm605, 0, %v621
      %623 = vst [vmem:[#allocation2 + $0x2c] sm:$0x1] %v622
      %v624 = vld [vmem:[#allocation2 + $0x34] sm:$0x1]
      %v625 = vsel %vm605, 0, %v624
      %626 = vst [vmem:[#allocation2 + $0x34] sm:$0x1] %v625
      %v627 = vld [vmem:[#allocation2 + $0x3c] sm:$0x1]
      %v628 = vsel %vm605, 0, %v627
      %629 = vst [vmem:[#allocation2 + $0x3c] sm:$0x1] %v628
      %v631 = vshrl.u32 %v569, 16
      %v633 = vrot.slane %v631, 7
      %v634 = vshll.u32 %v569, 16
      %v636 = vor.u32 %v633, %v634
      %v637 = vrot.slane %v633, 4
      %v639 = vshrl.u32 %v570, 16
      %v641 = vrot.slane %v639, 7
      %v642 = vshll.u32 %v570, 16
      %v644 = vor.u32 %v641, %v642
      %v645 = vrot.slane %v641, 4
      %vm650 = vcmask 27648
      %vm651 = vmand %vm650, %vm604
      %v652 = vld [vmem:[#allocation2] sm:$0xf]
      %v653 = vsel %vm651, %v636, %v652
      %654 = vst [vmem:[#allocation2] sm:$0xf] %v653
      %v655 = vld [vmem:[#allocation2 + $0x4] sm:$0x1]
      %v656 = vsel %vm579, %v637, %v655
      %657 = vst [vmem:[#allocation2 + $0x4] sm:$0x1] %v656
      %v658 = vld [vmem:[#allocation2 + $0x8] sm:$0xf]
      %v659 = vsel %vm651, %v644, %v658
      %660 = vst [vmem:[#allocation2 + $0x8] sm:$0xf] %v659
      %v661 = vld [vmem:[#allocation2 + $0xc] sm:$0x1]
      %v662 = vsel %vm579, %v645, %v661
      %663 = vst [vmem:[#allocation2 + $0xc] sm:$0x1] %v662
      %v665 = vshrl.u32 %v529, 16
      %v667 = vrot.slane %v665, 7
      %v668 = vshll.u32 %v529, 16
      %v670 = vor.u32 %v667, %v668
      %v671 = vrot.slane %v667, 4
      %v673 = vshrl.u32 %v530, 16
      %v675 = vrot.slane %v673, 7
      %v676 = vshll.u32 %v530, 16
      %v678 = vor.u32 %v675, %v676
      %v679 = vrot.slane %v675, 4
      %v681 = vshrl.u32 %v531, 16
      %v683 = vrot.slane %v681, 7
      %v684 = vshll.u32 %v531, 16
      %v686 = vor.u32 %v683, %v684
      %v687 = vrot.slane %v683, 4
      %v689 = vshrl.u32 %v532, 16
      %v691 = vrot.slane %v689, 7
      %v692 = vshll.u32 %v532, 16
      %v694 = vor.u32 %v691, %v692
      %v695 = vrot.slane %v691, 4
      %s704 = scalar_lea.vmem [#allocation2], 16
      %v705 = vld [vmem:[%s704] sm:$0xf]
      %v706 = vsel %vm651, %v670, %v705
      %707 = vst [vmem:[%s704] sm:$0xf] %v706
      %v708 = vld [vmem:[%s704 + $0x4] sm:$0x1]
      %v709 = vsel %vm579, %v671, %v708
      %710 = vst [vmem:[%s704 + $0x4] sm:$0x1] %v709
      %v711 = vld [vmem:[%s704 + $0x8] sm:$0xf]
      %v712 = vsel %vm651, %v678, %v711
      %713 = vst [vmem:[%s704 + $0x8] sm:$0xf] %v712
      %v714 = vld [vmem:[%s704 + $0xc] sm:$0x1]
      %v715 = vsel %vm579, %v679, %v714
      %716 = vst [vmem:[%s704 + $0xc] sm:$0x1] %v715
      %v717 = vld [vmem:[%s704 + $0x10] sm:$0xf]
      %v718 = vsel %vm651, %v686, %v717
      %719 = vst [vmem:[%s704 + $0x10] sm:$0xf] %v718
      %v720 = vld [vmem:[%s704 + $0x14] sm:$0x1]
      %v721 = vsel %vm579, %v687, %v720
      %722 = vst [vmem:[%s704 + $0x14] sm:$0x1] %v721
      %v723 = vld [vmem:[%s704 + $0x18] sm:$0xf]
      %v724 = vsel %vm651, %v694, %v723
      %725 = vst [vmem:[%s704 + $0x18] sm:$0xf] %v724
      %v726 = vld [vmem:[%s704 + $0x1c] sm:$0x1]
      %v727 = vsel %vm579, %v695, %v726
      %728 = vst [vmem:[%s704 + $0x1c] sm:$0x1] %v727
      %v730 = vshrl.u32 %v575, 16
      %v732 = vrot.slane %v730, 7
      %v733 = vshll.u32 %v575, 16
      %v735 = vor.u32 %v732, %v733
      %v736 = vrot.slane %v732, 4
      %v738 = vshrl.u32 %v576, 16
      %v740 = vrot.slane %v738, 7
      %v741 = vshll.u32 %v576, 16
      %v743 = vor.u32 %v740, %v741
      %v744 = vrot.slane %v740, 4
      %s749 = scalar_lea.vmem [#allocation2], 48
      %v750 = vld [vmem:[%s749] sm:$0xf]
      %v751 = vsel %vm651, %v735, %v750
      %752 = vst [vmem:[%s749] sm:$0xf] %v751
      %v753 = vld [vmem:[%s749 + $0x4] sm:$0x1]
      %v754 = vsel %vm579, %v736, %v753
      %755 = vst [vmem:[%s749 + $0x4] sm:$0x1] %v754
      %v756 = vld [vmem:[%s749 + $0x8] sm:$0xf]
      %v757 = vsel %vm651, %v743, %v756
      %758 = vst [vmem:[%s749 + $0x8] sm:$0xf] %v757
      %v759 = vld [vmem:[%s749 + $0xc] sm:$0x1]
      %v760 = vsel %vm579, %v744, %v759
      %761 = vst [vmem:[%s749 + $0xc] sm:$0x1] %v760
      %v762 = vld [vmem:[#allocation2] sm:$0xf]
      %v763 = vld [vmem:[#allocation2 + $0x4] sm:$0x1]
      %v764 = vld [vmem:[#allocation2 + $0x8] sm:$0xf]
      %v765 = vld [vmem:[#allocation2 + $0xc] sm:$0x1]
      %v766 = vld [vmem:[#allocation2 + $0x10] sm:$0xf]
      %v767 = vld [vmem:[#allocation2 + $0x14] sm:$0x1]
      %v768 = vld [vmem:[#allocation2 + $0x18] sm:$0xf]
      %v769 = vld [vmem:[#allocation2 + $0x1c] sm:$0x1]
      %v770 = vld [vmem:[#allocation2 + $0x20] sm:$0xf]
      %v771 = vld [vmem:[#allocation2 + $0x24] sm:$0x1]
      %v772 = vld [vmem:[#allocation2 + $0x28] sm:$0xf]
      %v773 = vld [vmem:[#allocation2 + $0x2c] sm:$0x1]
      %v774 = vld [vmem:[#allocation2 + $0x30] sm:$0xf]
      %v775 = vld [vmem:[#allocation2 + $0x34] sm:$0x1]
      %v776 = vld [vmem:[#allocation2 + $0x38] sm:$0xf]
      %v777 = vld [vmem:[#allocation2 + $0x3c] sm:$0x1]
      %v790 = vunpack.c.l.b16 %v762
      %v791 = vunpack.c.l.b16 %v763
      %v792 = vunpack.c.l.b16 %v764
      %v793 = vunpack.c.l.b16 %v765
      %v794 = vunpack.c.l.b16 %v766
      %v795 = vunpack.c.l.b16 %v767
      %v796 = vunpack.c.l.b16 %v768
      %v797 = vunpack.c.l.b16 %v769
      %v798 = vunpack.c.l.b16 %v770
      %v799 = vunpack.c.l.b16 %v771
      %v800 = vunpack.c.l.b16 %v772
      %v801 = vunpack.c.l.b16 %v773
      %v802 = vpack.c.b16 %v791, %v790
      %v803 = vpack.c.b16 %v793, %v792
      %v804 = vpack.c.b16 %v795, %v794
      %v805 = vpack.c.b16 %v797, %v796
      %v806 = vpack.c.b16 %v799, %v798
      %v807 = vpack.c.b16 %v801, %v800
      %v809 = vshrl.u32 %v802, 16
      %v811 = vshll.u32 %v802, 16
      %v813 = vrot.slane %v811, 1
      %v814 = vor.u32 %v809, %v813
      %v816 = vshrl.u32 %v803, 16
      %v818 = vshll.u32 %v803, 16
      %v820 = vrot.slane %v818, 1
      %v821 = vor.u32 %v816, %v820
      %v823 = vshrl.u32 %v804, 16
      %v825 = vshll.u32 %v804, 16
      %v827 = vrot.slane %v825, 1
      %v828 = vor.u32 %v823, %v827
      %v830 = vshrl.u32 %v805, 16
      %v832 = vshll.u32 %v805, 16
      %v834 = vrot.slane %v832, 1
      %v835 = vor.u32 %v830, %v834
      %v837 = vshrl.u32 %v806, 16
      %v839 = vshll.u32 %v806, 16
      %v841 = vrot.slane %v839, 1
      %v842 = vor.u32 %v837, %v841
      %v844 = vshrl.u32 %v807, 16
      %v846 = vshll.u32 %v807, 16
      %v848 = vrot.slane %v846, 1
      %v849 = vor.u32 %v844, %v848
      %850 = vrot.lane.b32.xlu0 %v814, 4
      %v851 = vpop.permute.xlu0 %850
      %852 = vrot.lane.b32.xlu0 %v821, 4
      %v853 = vpop.permute.xlu0 %852
      %854 = vrot.lane.b32.xlu0 %v828, 4
      %v855 = vpop.permute.xlu0 %854
      %856 = vrot.lane.b32.xlu0 %v835, 4
      %v857 = vpop.permute.xlu0 %856
      %858 = vrot.lane.b32.xlu0 %v842, 4
      %v859 = vpop.permute.xlu0 %858
      %860 = vrot.lane.b32.xlu0 %v849, 4
      %v861 = vpop.permute.xlu0 %860
      %v862 = vrot.slane %v802, 1
      %v863 = vrot.slane %v803, 1
      %v864 = vrot.slane %v804, 1
      %v865 = vrot.slane %v805, 1
      %v866 = vrot.slane %v806, 1
      %v867 = vrot.slane %v807, 1
      %868 = vrot.lane.b32.xlu0 %v862, 8
      %v869 = vpop.permute.xlu0 %868
      %870 = vrot.lane.b32.xlu0 %v863, 8
      %v871 = vpop.permute.xlu0 %870
      %872 = vrot.lane.b32.xlu0 %v864, 8
      %v873 = vpop.permute.xlu0 %872
      %874 = vrot.lane.b32.xlu0 %v865, 8
      %v875 = vpop.permute.xlu0 %874
      %876 = vrot.lane.b32.xlu0 %v866, 8
      %v877 = vpop.permute.xlu0 %876
      %878 = vrot.lane.b32.xlu0 %v867, 8
      %v879 = vpop.permute.xlu0 %878
      %vm880 = vcmask 31744
      %v883 = vsel %vm880, %v762, %v851
      %v886 = vsel %vm880, %v764, %v853
      %v889 = vsel %vm880, %v766, %v855
      %v892 = vsel %vm880, %v768, %v857
      %v895 = vsel %vm880, %v770, %v859
      %v898 = vsel %vm880, %v772, %v861
      %vm899 = vcmask 64512
      %v901 = vsel %vm899, %v883, %v869
      %v903 = vsel %vm899, %v886, %v871
      %v905 = vsel %vm899, %v889, %v873
      %v907 = vsel %vm899, %v892, %v875
      %v909 = vsel %vm899, %v895, %v877
      %v911 = vsel %vm899, %v898, %v879
      %v912 = vld [vmem:[%s3] sm:$0xf]
      %v913 = vld [vmem:[%s3 + $0x4] sm:$0x3]
      %v916 = vunpack.c.l.b16 %v774
      %v917 = vunpack.c.l.b16 %v775
      %v918 = vpack.c.b16 %v917, %v916
      %v920 = vshrl.u32 %v918, 16
      %v922 = vshll.u32 %v918, 16
      %v924 = vrot.slane %v922, 1
      %v925 = vor.u32 %v920, %v924
      %926 = vrot.lane.b32.xlu0 %v925, 4
      %v927 = vpop.permute.xlu0 %926
      %v928 = vrot.slane %v918, 1
      %929 = vrot.lane.b32.xlu0 %v928, 8
      %v930 = vpop.permute.xlu0 %929
      %v933 = vsel %vm880, %v774, %v927
      %v935 = vsel %vm899, %v933, %v930
      %s936 = scalar_lea.vmem %s3, 8
      %v937 = vld [vmem:[%s936] sm:$0xf]
      %v938 = vld [vmem:[%s936 + $0x4] sm:$0x3]
      %v945 = vunpack.c.l.b16 %v903
      %v946 = vunpack.c.l.b16 %v905
      %v947 = vunpack.c.l.b16 %v907
      %v948 = vunpack.c.l.b16 %v909
      %v949 = vunpack.c.l.b16 %v911
      %v950 = vunpack.c.l.b16 %v935
      %v951 = vpack.c.b16 %v946, %v945
      %v952 = vpack.c.b16 %v948, %v947
      %v953 = vpack.c.b16 %v950, %v949
      %v956 = vunpack.c.l.b16 %v937
      %v957 = vunpack.c.l.b16 %v938
      %v958 = vpack.c.b16 %v957, %v956
      %vm959 = vcmask 97280
      %v961 = vsel %vm959, %v951, 0
      %v964 = vsel %vm959, %v952, 0
      %v967 = vsel %vm959, %v953, 0
      %vm969 = vcmask 1045504
      %v971 = vsel %vm969, %v958, 0
      %973 = vmatprep.subr.bf16.mxu0 0
      %974 = vmatpush1.bf16.msra.mxu0 %v971
      %975 = vmatprep.subr.bf16.mxu0 0
      %976 = vmatpush1.bf16.msra.mxu0 0
      %977 = vmatprep.subr.bf16.mxu0 0
      %978 = vmatpush1.bf16.msra.mxu0 0
      %979 = vmatprep.subr.bf16.mxu0 0
      %980 = vmatpush1.bf16.msra.mxu0 0
      %981 = vmatprep.subr.bf16.mxu0 0
      %982 = vmatpush1.bf16.msra.mxu0 0
      %983 = vmatprep.subr.bf16.mxu0 0
      %984 = vmatpush1.bf16.msra.mxu0 0
      %985 = vmatprep.subr.bf16.mxu0 0
      %986 = vmatpush1.bf16.msra.mxu0 0
      %987 = vmatprep.subr.bf16.mxu0 0
      %988 = vmatpush1.bf16.msra.mxu0 0
      %989 = vmatprep.subr.bf16.mxu0 0
      %990 = vmatpush1.bf16.msra.mxu0 0
      %991 = vmatprep.subr.bf16.mxu0 0
      %992 = vmatpush1.bf16.msra.mxu0 0
      %993 = vmatprep.subr.bf16.mxu0 0
      %994 = vmatpush1.bf16.msra.mxu0 0
      %995 = vmatprep.subr.bf16.mxu0 0
      %996 = vmatpush1.bf16.msra.mxu0 0
      %997 = vmatprep.subr.bf16.mxu0 0
      %998 = vmatpush1.bf16.msra.mxu0 0
      %999 = vmatprep.subr.bf16.mxu0 0
      %1000 = vmatpush1.bf16.msra.mxu0 0
      %1001 = vmatprep.subr.bf16.mxu0 0
      %1002 = vmatpush1.bf16.msra.mxu0 0
      %1003 = vmatprep.subr.bf16.mxu0 0
      %1004 = vmatpush1.bf16.msra.mxu0 0
      %1005 = vmatprep.mubr.bf16.mxu0 0
      %1006 = vmatmul.mubr.bf16.gmra.mrb[0].mxu0 %v961
      %v1007 = vpop.f32.mrb[0].mxu0
      %v1008 = vadd.f32 0.0, %v1007
      %v1009 = vpop.f32.mrb[0].mxu0
      %v1010 = vpop.f32.mrb[0].mxu0
      %v1011 = vadd.f32 0.0, %v1010
      %v1012 = vpop.f32.mrb[0].mxu0
      %1013 = vmatprep.mubr.bf16.mxu0 0
      %1014 = vmatmul.mubr.bf16.gmra.mrb[0].mxu0 %v964
      %v1015 = vpop.f32.mrb[0].mxu0
      %v1016 = vadd.f32 0.0, %v1015
      %v1017 = vpop.f32.mrb[0].mxu0
      %v1018 = vpop.f32.mrb[0].mxu0
      %v1019 = vadd.f32 0.0, %v1018
      %v1020 = vpop.f32.mrb[0].mxu0
      %1021 = vmatprep.mubr.bf16.mxu0 0
      %1022 = vmatmul.mubr.bf16.gmra.mrb[0].mxu0 %v967
      %v1023 = vpop.f32.mrb[0].mxu0
      %v1024 = vadd.f32 0.0, %v1023
      %v1025 = vpop.f32.mrb[0].mxu0
      %v1026 = vpop.f32.mrb[0].mxu0
      %v1027 = vadd.f32 0.0, %v1026
      %v1028 = vpop.f32.mrb[0].mxu0
      %1029 = vdwg.mxu0
      %v1031 = vunpack.c.l.b16 %v901
      %v1032 = vpack.c.b16 %v945, %v1031
      %v1033 = vpack.c.b16 %v947, %v946
      %v1034 = vpack.c.b16 %v949, %v948
      %v1037 = vunpack.c.l.b16 %v912
      %v1038 = vunpack.c.l.b16 %v913
      %v1039 = vpack.c.b16 %v1038, %v1037
      %v1041 = vsel %vm959, %v1032, 0
      %v1044 = vsel %vm959, %v1033, 0
      %v1047 = vsel %vm959, %v1034, 0
      %v1050 = vsel %vm969, %v1039, 0
      %1052 = vmatprep.subr.bf16.mxu0 0
      %1053 = vmatpush1.bf16.msra.mxu0 %v1050
      %1054 = vmatprep.subr.bf16.mxu0 0
      %1055 = vmatpush1.bf16.msra.mxu0 0
      %1056 = vmatprep.subr.bf16.mxu0 0
      %1057 = vmatpush1.bf16.msra.mxu0 0
      %1058 = vmatprep.subr.bf16.mxu0 0
      %1059 = vmatpush1.bf16.msra.mxu0 0
      %1060 = vmatprep.subr.bf16.mxu0 0
      %1061 = vmatpush1.bf16.msra.mxu0 0
      %1062 = vmatprep.subr.bf16.mxu0 0
      %1063 = vmatpush1.bf16.msra.mxu0 0
      %1064 = vmatprep.subr.bf16.mxu0 0
      %1065 = vmatpush1.bf16.msra.mxu0 0
      %1066 = vmatprep.subr.bf16.mxu0 0
      %1067 = vmatpush1.bf16.msra.mxu0 0
      %1068 = vmatprep.subr.bf16.mxu0 0
      %1069 = vmatpush1.bf16.msra.mxu0 0
      %1070 = vmatprep.subr.bf16.mxu0 0
      %1071 = vmatpush1.bf16.msra.mxu0 0
      %1072 = vmatprep.subr.bf16.mxu0 0
      %1073 = vmatpush1.bf16.msra.mxu0 0
      %1074 = vmatprep.subr.bf16.mxu0 0
      %1075 = vmatpush1.bf16.msra.mxu0 0
      %1076 = vmatprep.subr.bf16.mxu0 0
      %1077 = vmatpush1.bf16.msra.mxu0 0
      %1078 = vmatprep.subr.bf16.mxu0 0
      %1079 = vmatpush1.bf16.msra.mxu0 0
      %1080 = vmatprep.subr.bf16.mxu0 0
      %1081 = vmatpush1.bf16.msra.mxu0 0
      %1082 = vmatprep.subr.bf16.mxu0 0
      %1083 = vmatpush1.bf16.msra.mxu0 0
      %1084 = vmatprep.mubr.bf16.mxu0 0
      %1085 = vmatmul.mubr.bf16.gmra.mrb[0].mxu0 %v1041
      %v1086 = vpop.f32.mrb[0].mxu0
      %v1087 = vadd.f32 %v1008, %v1086
      %v1088 = vpop.f32.mrb[0].mxu0
      %v1089 = vpop.f32.mrb[0].mxu0
      %v1090 = vadd.f32 %v1011, %v1089
      %v1091 = vpop.f32.mrb[0].mxu0
      %1092 = vmatprep.mubr.bf16.mxu0 0
      %1093 = vmatmul.mubr.bf16.gmra.mrb[0].mxu0 %v1044
      %v1094 = vpop.f32.mrb[0].mxu0
      %v1095 = vadd.f32 %v1016, %v1094
      %v1096 = vpop.f32.mrb[0].mxu0
      %v1097 = vpop.f32.mrb[0].mxu0
      %v1098 = vadd.f32 %v1019, %v1097
      %v1099 = vpop.f32.mrb[0].mxu0
      %1100 = vmatprep.mubr.bf16.mxu0 0
      %1101 = vmatmul.mubr.bf16.gmra.mrb[0].mxu0 %v1047
      %v1102 = vpop.f32.mrb[0].mxu0
      %v1103 = vadd.f32 %v1024, %v1102
      %v1104 = vpop.f32.mrb[0].mxu0
      %v1105 = vpop.f32.mrb[0].mxu0
      %v1106 = vadd.f32 %v1027, %v1105
      %v1107 = vpop.f32.mrb[0].mxu0
      %1108 = vdwg.mxu0
      %v1111 = vunpack.c.l.b16 %v776
      %v1112 = vunpack.c.l.b16 %v777
      %v1113 = vpack.c.b16 %v1112, %v1111
      %v1115 = vshrl.u32 %v1113, 16
      %v1117 = vshll.u32 %v1113, 16
      %v1119 = vrot.slane %v1117, 1
      %v1120 = vor.u32 %v1115, %v1119
      %1121 = vrot.lane.b32.xlu0 %v1120, 4
      %v1122 = vpop.permute.xlu0 %1121
      %v1123 = vrot.slane %v1113, 1
      %1124 = vrot.lane.b32.xlu0 %v1123, 8
      %v1125 = vpop.permute.xlu0 %1124
      %v1128 = vsel %vm880, %v776, %v1122
      %v1130 = vsel %vm899, %v1128, %v1125
      %s1131 = scalar_lea.vmem %s3, 16
      %v1132 = vld [vmem:[%s1131] sm:$0xf]
      %v1133 = vld [vmem:[%s1131 + $0x4] sm:$0x3]
      %v1135 = vunpack.c.l.b16 %v1130
      %v1136 = vpack.c.b16 %v1135, %v950
      %v1139 = vunpack.c.l.b16 %v1132
      %v1140 = vunpack.c.l.b16 %v1133
      %v1141 = vpack.c.b16 %v1140, %v1139
      %v1143 = vsel %vm959, %v1136, 0
      %v1146 = vsel %vm969, %v1141, 0
      %1148 = vmatprep.subr.bf16.mxu0 0
      %1149 = vmatpush1.bf16.msra.mxu0 %v1146
      %1150 = vmatprep.subr.bf16.mxu0 0
      %1151 = vmatpush1.bf16.msra.mxu0 0
      %1152 = vmatprep.subr.bf16.mxu0 0
      %1153 = vmatpush1.bf16.msra.mxu0 0
      %1154 = vmatprep.subr.bf16.mxu0 0
      %1155 = vmatpush1.bf16.msra.mxu0 0
      %1156 = vmatprep.subr.bf16.mxu0 0
      %1157 = vmatpush1.bf16.msra.mxu0 0
      %1158 = vmatprep.subr.bf16.mxu0 0
      %1159 = vmatpush1.bf16.msra.mxu0 0
      %1160 = vmatprep.subr.bf16.mxu0 0
      %1161 = vmatpush1.bf16.msra.mxu0 0
      %1162 = vmatprep.subr.bf16.mxu0 0
      %1163 = vmatpush1.bf16.msra.mxu0 0
      %1164 = vmatprep.subr.bf16.mxu0 0
      %1165 = vmatpush1.bf16.msra.mxu0 0
      %1166 = vmatprep.subr.bf16.mxu0 0
      %1167 = vmatpush1.bf16.msra.mxu0 0
      %1168 = vmatprep.subr.bf16.mxu0 0
      %1169 = vmatpush1.bf16.msra.mxu0 0
      %1170 = vmatprep.subr.bf16.mxu0 0
      %1171 = vmatpush1.bf16.msra.mxu0 0
      %1172 = vmatprep.subr.bf16.mxu0 0
      %1173 = vmatpush1.bf16.msra.mxu0 0
      %1174 = vmatprep.subr.bf16.mxu0 0
      %1175 = vmatpush1.bf16.msra.mxu0 0
      %1176 = vmatprep.subr.bf16.mxu0 0
      %1177 = vmatpush1.bf16.msra.mxu0 0
      %1178 = vmatprep.subr.bf16.mxu0 0
      %1179 = vmatpush1.bf16.msra.mxu0 0
      %1180 = vmatprep.mubr.bf16.mxu0 0
      %1181 = vmatmul.mubr.bf16.gmra.mrb[0].mxu0 %v1044
      %v1182 = vpop.f32.mrb[0].mxu0
      %v1183 = vadd.f32 0.0, %v1182
      %v1184 = vpop.f32.mrb[0].mxu0
      %v1185 = vpop.f32.mrb[0].mxu0
      %v1186 = vadd.f32 0.0, %v1185
      %v1187 = vpop.f32.mrb[0].mxu0
      %1188 = vmatprep.mubr.bf16.mxu0 0
      %1189 = vmatmul.mubr.bf16.gmra.mrb[0].mxu0 %v1047
      %v1190 = vpop.f32.mrb[0].mxu0
      %v1191 = vadd.f32 0.0, %v1190
      %v1192 = vpop.f32.mrb[0].mxu0
      %v1193 = vpop.f32.mrb[0].mxu0
      %v1194 = vadd.f32 0.0, %v1193
      %v1195 = vpop.f32.mrb[0].mxu0
      %1196 = vmatprep.mubr.bf16.mxu0 0
      %1197 = vmatmul.mubr.bf16.gmra.mrb[0].mxu0 %v1143
      %v1198 = vpop.f32.mrb[0].mxu0
      %v1199 = vadd.f32 0.0, %v1198
      %v1200 = vpop.f32.mrb[0].mxu0
      %v1201 = vpop.f32.mrb[0].mxu0
      %v1202 = vadd.f32 0.0, %v1201
      %v1203 = vpop.f32.mrb[0].mxu0
      %1204 = vdwg.mxu0
      %v1205 = vadd.f32 %v1087, %v1183
      %v1206 = vadd.f32 %v1090, %v1186
      %v1207 = vadd.f32 %v1095, %v1191
      %v1208 = vadd.f32 %v1098, %v1194
      %v1209 = vadd.f32 %v1103, %v1199
      %v1210 = vadd.f32 %v1106, %v1202
      %v1211 = vld [vmem:[%s4] sm:$0x1]
      %v1213 = vlaneseq
      %v1214 = vshrl.u32 %v1213, 7
      %v1215 = vsub.s32 0, %v1214
      %v1216 = vrot.slane %v1211, %v1215
      %v1218 = vmul.f32 %v1205, %v1216
      %v1219 = vmul.f32 %v1206, %v1216
      %v1220 = vmul.f32 %v1207, %v1216
      %v1221 = vmul.f32 %v1208, %v1216
      %v1222 = vmul.f32 %v1209, %v1216
      %v1223 = vmul.f32 %v1210, %v1216
      %v1224 = vld [vmem:[%s5] sm:$0x1]
      %v1226 = vlaneseq
      %v1227 = vshrl.u32 %v1226, 7
      %v1228 = vsub.s32 0, %v1227
      %v1229 = vrot.slane %v1224, %v1228
      %v1231 = vadd.f32 %v1218, %v1229
      %v1232 = vadd.f32 %v1219, %v1229
      %v1233 = vadd.f32 %v1220, %v1229
      %v1234 = vadd.f32 %v1221, %v1229
      %v1235 = vadd.f32 %v1222, %v1229
      %v1236 = vadd.f32 %v1223, %v1229
      %v1237 = vmax.f32 %v1231, 0.0
      %v1238 = vmax.f32 %v1232, 0.0
      %v1239 = vmax.f32 %v1233, 0.0
      %v1240 = vmax.f32 %v1234, 0.0
      %v1241 = vmax.f32 %v1235, 0.0
      %v1242 = vmax.f32 %v1236, 0.0
      %v1243 = vpack.c.bf16 %v1237, %v1237
      %v1244 = vpack.c.bf16 %v1238, %v1238
      %v1245 = vpack.c.bf16 %v1239, %v1239
      %v1246 = vpack.c.bf16 %v1240, %v1240
      %v1247 = vpack.c.bf16 %v1241, %v1241
      %v1248 = vpack.c.bf16 %v1242, %v1242
      %v1255 = vunpack.c.l.b16 %v1243
      %v1256 = vunpack.c.l.b16 %v1244
      %v1257 = vunpack.c.l.b16 %v1245
      %v1258 = vunpack.c.l.b16 %v1246
      %v1259 = vunpack.c.l.b16 %v1247
      %v1260 = vunpack.c.l.b16 %v1248
      %v1261 = vpack.c.b16 %v1255, %v1255
      %v1262 = vpack.c.b16 %v1256, %v1256
      %v1263 = vpack.c.b16 %v1257, %v1257
      %v1264 = vpack.c.b16 %v1258, %v1258
      %v1265 = vpack.c.b16 %v1259, %v1259
      %v1266 = vpack.c.b16 %v1260, %v1260
      %v1268 = vshrl.u32 %v1261, 16
      %v1270 = vrot.slane %v1268, 7
      %v1271 = vshll.u32 %v1261, 16
      %v1273 = vor.u32 %v1270, %v1271
      %v1274 = vrot.slane %v1270, 4
      %v1276 = vshrl.u32 %v1262, 16
      %v1278 = vrot.slane %v1276, 7
      %v1279 = vshll.u32 %v1262, 16
      %v1281 = vor.u32 %v1278, %v1279
      %v1282 = vrot.slane %v1278, 4
      %v1284 = vshrl.u32 %v1263, 16
      %v1286 = vrot.slane %v1284, 7
      %v1287 = vshll.u32 %v1263, 16
      %v1289 = vor.u32 %v1286, %v1287
      %v1290 = vrot.slane %v1286, 4
      %v1292 = vshrl.u32 %v1264, 16
      %v1294 = vrot.slane %v1292, 7
      %v1295 = vshll.u32 %v1264, 16
      %v1297 = vor.u32 %v1294, %v1295
      %v1298 = vrot.slane %v1294, 4
      %v1300 = vshrl.u32 %v1265, 16
      %v1302 = vrot.slane %v1300, 7
      %v1303 = vshll.u32 %v1265, 16
      %v1305 = vor.u32 %v1302, %v1303
      %v1306 = vrot.slane %v1302, 4
      %v1308 = vshrl.u32 %v1266, 16
      %v1310 = vrot.slane %v1308, 7
      %v1311 = vshll.u32 %v1266, 16
      %v1313 = vor.u32 %v1310, %v1311
      %v1314 = vrot.slane %v1310, 4
      %vm1327 = vcmask 60416
      %vm1328 = vmand %vm1327, %vm604
      %v1329 = vld [vmem:[#allocation3] sm:$0xf]
      %v1330 = vsel %vm1328, %v1273, %v1329
      %1331 = vst [vmem:[#allocation3] sm:$0xf] %v1330
      %vm1332 = vcmask 57344
      %vm1333 = vmand %vm1332, %vm578
      %v1334 = vld [vmem:[#allocation3 + $0x4] sm:$0x1]
      %v1335 = vsel %vm1333, %v1274, %v1334
      %1336 = vst [vmem:[#allocation3 + $0x4] sm:$0x1] %v1335
      %v1337 = vld [vmem:[#allocation3 + $0x8] sm:$0xf]
      %v1338 = vsel %vm1328, %v1281, %v1337
      %1339 = vst [vmem:[#allocation3 + $0x8] sm:$0xf] %v1338
      %v1340 = vld [vmem:[#allocation3 + $0xc] sm:$0x1]
      %v1341 = vsel %vm1333, %v1282, %v1340
      %1342 = vst [vmem:[#allocation3 + $0xc] sm:$0x1] %v1341
      %v1343 = vld [vmem:[#allocation3 + $0x10] sm:$0xf]
      %v1344 = vsel %vm1328, %v1289, %v1343
      %1345 = vst [vmem:[#allocation3 + $0x10] sm:$0xf] %v1344
      %v1346 = vld [vmem:[#allocation3 + $0x14] sm:$0x1]
      %v1347 = vsel %vm1333, %v1290, %v1346
      %1348 = vst [vmem:[#allocation3 + $0x14] sm:$0x1] %v1347
      %v1349 = vld [vmem:[#allocation3 + $0x18] sm:$0xf]
      %v1350 = vsel %vm1328, %v1297, %v1349
      %1351 = vst [vmem:[#allocation3 + $0x18] sm:$0xf] %v1350
      %v1352 = vld [vmem:[#allocation3 + $0x1c] sm:$0x1]
      %v1353 = vsel %vm1333, %v1298, %v1352
      %1354 = vst [vmem:[#allocation3 + $0x1c] sm:$0x1] %v1353
      %v1355 = vld [vmem:[#allocation3 + $0x20] sm:$0xf]
      %v1356 = vsel %vm1328, %v1305, %v1355
      %1357 = vst [vmem:[#allocation3 + $0x20] sm:$0xf] %v1356
      %v1358 = vld [vmem:[#allocation3 + $0x24] sm:$0x1]
      %v1359 = vsel %vm1333, %v1306, %v1358
      %1360 = vst [vmem:[#allocation3 + $0x24] sm:$0x1] %v1359
      %v1361 = vld [vmem:[#allocation3 + $0x28] sm:$0xf]
      %v1362 = vsel %vm1328, %v1313, %v1361
      %1363 = vst [vmem:[#allocation3 + $0x28] sm:$0xf] %v1362
      %v1364 = vld [vmem:[#allocation3 + $0x2c] sm:$0x1]
      %v1365 = vsel %vm1333, %v1314, %v1364
      %1366 = vst [vmem:[#allocation3 + $0x2c] sm:$0x1] %v1365
      %v1367 = vld [vmem:[#allocation3] sm:$0x1]
      %v1368 = vsel %vm1333, 0, %v1367
      %1369 = vst [vmem:[#allocation3] sm:$0x1] %v1368
      %v1370 = vld [vmem:[#allocation3 + $0x8] sm:$0x1]
      %v1371 = vsel %vm1333, 0, %v1370
      %1372 = vst [vmem:[#allocation3 + $0x8] sm:$0x1] %v1371
      %v1373 = vld [vmem:[#allocation3 + $0x10] sm:$0x1]
      %v1374 = vsel %vm1333, 0, %v1373
      %1375 = vst [vmem:[#allocation3 + $0x10] sm:$0x1] %v1374
      %v1376 = vld [vmem:[#allocation3 + $0x18] sm:$0x1]
      %v1377 = vsel %vm1333, 0, %v1376
      %1378 = vst [vmem:[#allocation3 + $0x18] sm:$0x1] %v1377
      %v1379 = vld [vmem:[#allocation3 + $0x20] sm:$0x1]
      %v1380 = vsel %vm1333, 0, %v1379
      %1381 = vst [vmem:[#allocation3 + $0x20] sm:$0x1] %v1380
      %v1382 = vld [vmem:[#allocation3 + $0x28] sm:$0x1]
      %v1383 = vsel %vm1333, 0, %v1382
      %1384 = vst [vmem:[#allocation3 + $0x28] sm:$0x1] %v1383
      %vm1385 = vmand %vm1332, %vm604
      %v1386 = vld [vmem:[#allocation3 + $0x4] sm:$0x1]
      %v1387 = vsel %vm1385, 0, %v1386
      %1388 = vst [vmem:[#allocation3 + $0x4] sm:$0x1] %v1387
      %v1389 = vld [vmem:[#allocation3 + $0xc] sm:$0x1]
      %v1390 = vsel %vm1385, 0, %v1389
      %1391 = vst [vmem:[#allocation3 + $0xc] sm:$0x1] %v1390
      %v1392 = vld [vmem:[#allocation3 + $0x14] sm:$0x1]
      %v1393 = vsel %vm1385, 0, %v1392
      %1394 = vst [vmem:[#allocation3 + $0x14] sm:$0x1] %v1393
      %v1395 = vld [vmem:[#allocation3 + $0x1c] sm:$0x1]
      %v1396 = vsel %vm1385, 0, %v1395
      %1397 = vst [vmem:[#allocation3 + $0x1c] sm:$0x1] %v1396
      %v1398 = vld [vmem:[#allocation3 + $0x24] sm:$0x1]
      %v1399 = vsel %vm1385, 0, %v1398
      %1400 = vst [vmem:[#allocation3 + $0x24] sm:$0x1] %v1399
      %v1401 = vld [vmem:[#allocation3 + $0x2c] sm:$0x1]
      %v1402 = vsel %vm1385, 0, %v1401
      %1403 = vst [vmem:[#allocation3 + $0x2c] sm:$0x1] %v1402
      %p1404 = scmp.eq.s32.totalorder %s25, 0
      // Predicated region
      $region57: #{down_forward.1} parent=55 // pred_check
        %p1405 = pneg %p1404
      $region58: #{down_forward.1} parent=55 // pred_check_branch
        %1407 = sbr.rel (%p1405) target = $region60
      $region59: #{down_forward.1} parent=55 // pred_region
        %vm1408 = vcmask 60416
        %1409 = vst.msk [vmem:[#allocation3] sm:$0xf] %vm1408, 0
        %vm1410 = vcmask 57344
        %1411 = vst.msk [vmem:[#allocation3 + $0x4] sm:$0x1] %vm1410, 0
      $region60: #{down_forward.1} parent=55 // pred_fallthru
        _
      %p1412 = scmp.eq.s32.totalorder %s25, 1
      // Predicated region
      $region61: #{down_forward.1} parent=55 // pred_check
        %p1413 = pneg %p1412
      $region62: #{down_forward.1} parent=55 // pred_check_branch
        %1415 = sbr.rel (%p1413) target = $region64
      $region63: #{down_forward.1} parent=55 // pred_region
        %s1416 = scalar_lea.vmem [#allocation3], 40
        %vm1417 = vcmask 60416
        %1418 = vst.msk [vmem:[%s1416] sm:$0xf] %vm1417, 0
        %vm1419 = vcmask 57344
        %1420 = vst.msk [vmem:[%s1416 + $0x4] sm:$0x1] %vm1419, 0
      $region64: #{down_forward.1} parent=55 // pred_fallthru
        _
      %v1421 = vld [vmem:[#allocation3] sm:$0xf]
      %v1422 = vld [vmem:[#allocation3 + $0x4] sm:$0x1]
      %v1423 = vld [vmem:[#allocation3 + $0x8] sm:$0xf]
      %v1424 = vld [vmem:[#allocation3 + $0xc] sm:$0x1]
      %v1425 = vld [vmem:[#allocation3 + $0x10] sm:$0xf]
      %v1426 = vld [vmem:[#allocation3 + $0x14] sm:$0x1]
      %v1427 = vld [vmem:[#allocation3 + $0x18] sm:$0xf]
      %v1428 = vld [vmem:[#allocation3 + $0x1c] sm:$0x1]
      %v1429 = vld [vmem:[#allocation3 + $0x20] sm:$0xf]
      %v1430 = vld [vmem:[#allocation3 + $0x24] sm:$0x1]
      %v1431 = vld [vmem:[#allocation3 + $0x28] sm:$0xf]
      %v1432 = vld [vmem:[#allocation3 + $0x2c] sm:$0x1]
      %v1441 = vunpack.c.l.b16 %v1421
      %v1442 = vunpack.c.l.b16 %v1422
      %v1443 = vunpack.c.l.b16 %v1423
      %v1444 = vunpack.c.l.b16 %v1424
      %v1445 = vunpack.c.l.b16 %v1425
      %v1446 = vunpack.c.l.b16 %v1426
      %v1447 = vunpack.c.l.b16 %v1427
      %v1448 = vunpack.c.l.b16 %v1428
      %v1449 = vpack.c.b16 %v1442, %v1441
      %v1450 = vpack.c.b16 %v1444, %v1443
      %v1451 = vpack.c.b16 %v1446, %v1445
      %v1452 = vpack.c.b16 %v1448, %v1447
      %v1454 = vshrl.u32 %v1449, 16
      %v1456 = vshll.u32 %v1449, 16
      %v1458 = vrot.slane %v1456, 1
      %v1459 = vor.u32 %v1454, %v1458
      %v1461 = vshrl.u32 %v1450, 16
      %v1463 = vshll.u32 %v1450, 16
      %v1465 = vrot.slane %v1463, 1
      %v1466 = vor.u32 %v1461, %v1465
      %v1468 = vshrl.u32 %v1451, 16
      %v1470 = vshll.u32 %v1451, 16
      %v1472 = vrot.slane %v1470, 1
      %v1473 = vor.u32 %v1468, %v1472
      %v1475 = vshrl.u32 %v1452, 16
      %v1477 = vshll.u32 %v1452, 16
      %v1479 = vrot.slane %v1477, 1
      %v1480 = vor.u32 %v1475, %v1479
      %1481 = vrot.lane.b32.xlu0 %v1459, 8
      %v1482 = vpop.permute.xlu0 %1481
      %1483 = vrot.lane.b32.xlu0 %v1466, 8
      %v1484 = vpop.permute.xlu0 %1483
      %1485 = vrot.lane.b32.xlu0 %v1473, 8
      %v1486 = vpop.permute.xlu0 %1485
      %1487 = vrot.lane.b32.xlu0 %v1480, 8
      %v1488 = vpop.permute.xlu0 %1487
      %v1489 = vrot.slane %v1449, 1
      %v1490 = vrot.slane %v1450, 1
      %v1491 = vrot.slane %v1451, 1
      %v1492 = vrot.slane %v1452, 1
      %1493 = vrot.lane.b32.xlu0 %v1489, 16
      %v1494 = vpop.permute.xlu0 %1493
      %1495 = vrot.lane.b32.xlu0 %v1490, 16
      %v1496 = vpop.permute.xlu0 %1495
      %1497 = vrot.lane.b32.xlu0 %v1491, 16
      %v1498 = vpop.permute.xlu0 %1497
      %1499 = vrot.lane.b32.xlu0 %v1492, 16
      %v1500 = vpop.permute.xlu0 %1499
      %v1503 = vsel %vm899, %v1421, %v1482
      %v1506 = vsel %vm899, %v1423, %v1484
      %v1509 = vsel %vm899, %v1425, %v1486
      %v1512 = vsel %vm899, %v1427, %v1488
      %vm1513 = vcmask 130048
      %v1515 = vsel %vm1513, %v1503, %v1494
      %v1517 = vsel %vm1513, %v1506, %v1496
      %v1519 = vsel %vm1513, %v1509, %v1498
      %v1521 = vsel %vm1513, %v1512, %v1500
      %v1522 = vld [vmem:[%s6] sm:$0xf]
      %v1523 = vld [vmem:[%s6 + $0x4] sm:$0xf]
      %v1524 = vld [vmem:[%s6 + $0x8] sm:$0xf]
      %v1527 = vunpack.c.l.b16 %v1429
      %v1528 = vunpack.c.l.b16 %v1430
      %v1529 = vpack.c.b16 %v1528, %v1527
      %v1531 = vshrl.u32 %v1529, 16
      %v1533 = vshll.u32 %v1529, 16
      %v1535 = vrot.slane %v1533, 1
      %v1536 = vor.u32 %v1531, %v1535
      %1537 = vrot.lane.b32.xlu0 %v1536, 8
      %v1538 = vpop.permute.xlu0 %1537
      %v1539 = vrot.slane %v1529, 1
      %1540 = vrot.lane.b32.xlu0 %v1539, 16
      %v1541 = vpop.permute.xlu0 %1540
      %v1544 = vsel %vm899, %v1429, %v1538
      %v1546 = vsel %vm1513, %v1544, %v1541
      %s1547 = scalar_lea.vmem %s6, 12
      %v1548 = vld [vmem:[%s1547] sm:$0xf]
      %v1549 = vld [vmem:[%s1547 + $0x4] sm:$0xf]
      %v1550 = vld [vmem:[%s1547 + $0x8] sm:$0xf]
      %v1555 = vunpack.c.l.b16 %v1517
      %v1556 = vunpack.c.l.b16 %v1519
      %v1557 = vunpack.c.l.b16 %v1521
      %v1558 = vunpack.c.l.b16 %v1546
      %v1559 = vpack.c.b16 %v1556, %v1555
      %v1560 = vpack.c.b16 %v1558, %v1557
      %v1564 = vunpack.c.l.b16 %v1548
      %v1565 = vunpack.c.l.b16 %v1549
      %v1566 = vunpack.c.l.b16 %v1550
      %v1567 = vpack.c.b16 %v1565, %v1564
      %v1568 = vpack.c.b16 %v1566, %v1566
      %vm1570 = vcmask 195584
      %v1572 = vsel %vm1570, %v1559, 0
      %v1575 = vsel %vm1570, %v1560, 0
      %vm1577 = vcmask 1043456
      %v1579 = vsel %vm1577, %v1568, 0
      %1581 = vmatprep.subr.bf16.mxu0 0
      %1582 = vmatpush1.bf16.msra.mxu0 %v1567
      %1583 = vmatprep.subr.bf16.mxu0 0
      %1584 = vmatpush1.bf16.msra.mxu0 %v1579
      %1585 = vmatprep.subr.bf16.mxu0 0
      %1586 = vmatpush1.bf16.msra.mxu0 0
      %1587 = vmatprep.subr.bf16.mxu0 0
      %1588 = vmatpush1.bf16.msra.mxu0 0
      %1589 = vmatprep.subr.bf16.mxu0 0
      %1590 = vmatpush1.bf16.msra.mxu0 0
      %1591 = vmatprep.subr.bf16.mxu0 0
      %1592 = vmatpush1.bf16.msra.mxu0 0
      %1593 = vmatprep.subr.bf16.mxu0 0
      %1594 = vmatpush1.bf16.msra.mxu0 0
      %1595 = vmatprep.subr.bf16.mxu0 0
      %1596 = vmatpush1.bf16.msra.mxu0 0
      %1597 = vmatprep.subr.bf16.mxu0 0
      %1598 = vmatpush1.bf16.msra.mxu0 0
      %1599 = vmatprep.subr.bf16.mxu0 0
      %1600 = vmatpush1.bf16.msra.mxu0 0
      %1601 = vmatprep.subr.bf16.mxu0 0
      %1602 = vmatpush1.bf16.msra.mxu0 0
      %1603 = vmatprep.subr.bf16.mxu0 0
      %1604 = vmatpush1.bf16.msra.mxu0 0
      %1605 = vmatprep.subr.bf16.mxu0 0
      %1606 = vmatpush1.bf16.msra.mxu0 0
      %1607 = vmatprep.subr.bf16.mxu0 0
      %1608 = vmatpush1.bf16.msra.mxu0 0
      %1609 = vmatprep.subr.bf16.mxu0 0
      %1610 = vmatpush1.bf16.msra.mxu0 0
      %1611 = vmatprep.subr.bf16.mxu0 0
      %1612 = vmatpush1.bf16.msra.mxu0 0
      %1613 = vmatprep.mubr.bf16.mxu0 0
      %1614 = vmatmul.mubr.bf16.gmra.mrb[0].mxu0 %v1572
      %v1615 = vpop.f32.mrb[0].mxu0
      %v1616 = vadd.f32 0.0, %v1615
      %v1617 = vpop.f32.mrb[0].mxu0
      %v1618 = vpop.f32.mrb[0].mxu0
      %v1619 = vadd.f32 0.0, %v1618
      %v1620 = vpop.f32.mrb[0].mxu0
      %1621 = vmatprep.mubr.bf16.mxu0 0
      %1622 = vmatmul.mubr.bf16.gmra.mrb[0].mxu0 %v1575
      %v1623 = vpop.f32.mrb[0].mxu0
      %v1624 = vadd.f32 0.0, %v1623
      %v1625 = vpop.f32.mrb[0].mxu0
      %v1626 = vpop.f32.mrb[0].mxu0
      %v1627 = vadd.f32 0.0, %v1626
      %v1628 = vpop.f32.mrb[0].mxu0
      %1629 = vdwg.mxu0
      %v1631 = vunpack.c.l.b16 %v1515
      %v1632 = vpack.c.b16 %v1555, %v1631
      %v1633 = vpack.c.b16 %v1557, %v1556
      %v1637 = vunpack.c.l.b16 %v1522
      %v1638 = vunpack.c.l.b16 %v1523
      %v1639 = vunpack.c.l.b16 %v1524
      %v1640 = vpack.c.b16 %v1638, %v1637
      %v1641 = vpack.c.b16 %v1639, %v1639
      %v1644 = vsel %vm1570, %v1632, 0
      %v1647 = vsel %vm1570, %v1633, 0
      %v1650 = vsel %vm1577, %v1641, 0
      %1652 = vmatprep.subr.bf16.mxu0 0
      %1653 = vmatpush1.bf16.msra.mxu0 %v1640
      %1654 = vmatprep.subr.bf16.mxu0 0
      %1655 = vmatpush1.bf16.msra.mxu0 %v1650
      %1656 = vmatprep.subr.bf16.mxu0 0
      %1657 = vmatpush1.bf16.msra.mxu0 0
      %1658 = vmatprep.subr.bf16.mxu0 0
      %1659 = vmatpush1.bf16.msra.mxu0 0
      %1660 = vmatprep.subr.bf16.mxu0 0
      %1661 = vmatpush1.bf16.msra.mxu0 0
      %1662 = vmatprep.subr.bf16.mxu0 0
      %1663 = vmatpush1.bf16.msra.mxu0 0
      %1664 = vmatprep.subr.bf16.mxu0 0
      %1665 = vmatpush1.bf16.msra.mxu0 0
      %1666 = vmatprep.subr.bf16.mxu0 0
      %1667 = vmatpush1.bf16.msra.mxu0 0
      %1668 = vmatprep.subr.bf16.mxu0 0
      %1669 = vmatpush1.bf16.msra.mxu0 0
      %1670 = vmatprep.subr.bf16.mxu0 0
      %1671 = vmatpush1.bf16.msra.mxu0 0
      %1672 = vmatprep.subr.bf16.mxu0 0
      %1673 = vmatpush1.bf16.msra.mxu0 0
      %1674 = vmatprep.subr.bf16.mxu0 0
      %1675 = vmatpush1.bf16.msra.mxu0 0
      %1676 = vmatprep.subr.bf16.mxu0 0
      %1677 = vmatpush1.bf16.msra.mxu0 0
      %1678 = vmatprep.subr.bf16.mxu0 0
      %1679 = vmatpush1.bf16.msra.mxu0 0
      %1680 = vmatprep.subr.bf16.mxu0 0
      %1681 = vmatpush1.bf16.msra.mxu0 0
      %1682 = vmatprep.subr.bf16.mxu0 0
      %1683 = vmatpush1.bf16.msra.mxu0 0
      %1684 = vmatprep.mubr.bf16.mxu0 0
      %1685 = vmatmul.mubr.bf16.gmra.mrb[0].mxu0 %v1644
      %v1686 = vpop.f32.mrb[0].mxu0
      %v1687 = vadd.f32 %v1616, %v1686
      %v1688 = vpop.f32.mrb[0].mxu0
      %v1689 = vpop.f32.mrb[0].mxu0
      %v1690 = vadd.f32 %v1619, %v1689
      %v1691 = vpop.f32.mrb[0].mxu0
      %1692 = vmatprep.mubr.bf16.mxu0 0
      %1693 = vmatmul.mubr.bf16.gmra.mrb[0].mxu0 %v1647
      %v1694 = vpop.f32.mrb[0].mxu0
      %v1695 = vadd.f32 %v1624, %v1694
      %v1696 = vpop.f32.mrb[0].mxu0
      %v1697 = vpop.f32.mrb[0].mxu0
      %v1698 = vadd.f32 %v1627, %v1697
      %v1699 = vpop.f32.mrb[0].mxu0
      %1700 = vdwg.mxu0
      %v1703 = vunpack.c.l.b16 %v1431
      %v1704 = vunpack.c.l.b16 %v1432
      %v1705 = vpack.c.b16 %v1704, %v1703
      %v1707 = vshrl.u32 %v1705, 16
      %v1709 = vshll.u32 %v1705, 16
      %v1711 = vrot.slane %v1709, 1
      %v1712 = vor.u32 %v1707, %v1711
      %1713 = vrot.lane.b32.xlu0 %v1712, 8
      %v1714 = vpop.permute.xlu0 %1713
      %v1715 = vrot.slane %v1705, 1
      %1716 = vrot.lane.b32.xlu0 %v1715, 16
      %v1717 = vpop.permute.xlu0 %1716
      %v1720 = vsel %vm899, %v1431, %v1714
      %v1722 = vsel %vm1513, %v1720, %v1717
      %s1723 = scalar_lea.vmem %s6, 24
      %v1724 = vld [vmem:[%s1723] sm:$0xf]
      %v1725 = vld [vmem:[%s1723 + $0x4] sm:$0xf]
      %v1726 = vld [vmem:[%s1723 + $0x8] sm:$0xf]
      %v1728 = vunpack.c.l.b16 %v1722
      %v1729 = vpack.c.b16 %v1728, %v1558
      %v1733 = vunpack.c.l.b16 %v1724
      %v1734 = vunpack.c.l.b16 %v1725
      %v1735 = vunpack.c.l.b16 %v1726
      %v1736 = vpack.c.b16 %v1734, %v1733
      %v1737 = vpack.c.b16 %v1735, %v1735
      %v1740 = vsel %vm1570, %v1729, 0
      %v1743 = vsel %vm1577, %v1737, 0
      %1745 = vmatprep.subr.bf16.mxu0 0
      %1746 = vmatpush1.bf16.msra.mxu0 %v1736
      %1747 = vmatprep.subr.bf16.mxu0 0
      %1748 = vmatpush1.bf16.msra.mxu0 %v1743
      %1749 = vmatprep.subr.bf16.mxu0 0
      %1750 = vmatpush1.bf16.msra.mxu0 0
      %1751 = vmatprep.subr.bf16.mxu0 0
      %1752 = vmatpush1.bf16.msra.mxu0 0
      %1753 = vmatprep.subr.bf16.mxu0 0
      %1754 = vmatpush1.bf16.msra.mxu0 0
      %1755 = vmatprep.subr.bf16.mxu0 0
      %1756 = vmatpush1.bf16.msra.mxu0 0
      %1757 = vmatprep.subr.bf16.mxu0 0
      %1758 = vmatpush1.bf16.msra.mxu0 0
      %1759 = vmatprep.subr.bf16.mxu0 0
      %1760 = vmatpush1.bf16.msra.mxu0 0
      %1761 = vmatprep.subr.bf16.mxu0 0
      %1762 = vmatpush1.bf16.msra.mxu0 0
      %1763 = vmatprep.subr.bf16.mxu0 0
      %1764 = vmatpush1.bf16.msra.mxu0 0
      %1765 = vmatprep.subr.bf16.mxu0 0
      %1766 = vmatpush1.bf16.msra.mxu0 0
      %1767 = vmatprep.subr.bf16.mxu0 0
      %1768 = vmatpush1.bf16.msra.mxu0 0
      %1769 = vmatprep.subr.bf16.mxu0 0
      %1770 = vmatpush1.bf16.msra.mxu0 0
      %1771 = vmatprep.subr.bf16.mxu0 0
      %1772 = vmatpush1.bf16.msra.mxu0 0
      %1773 = vmatprep.subr.bf16.mxu0 0
      %1774 = vmatpush1.bf16.msra.mxu0 0
      %1775 = vmatprep.subr.bf16.mxu0 0
      %1776 = vmatpush1.bf16.msra.mxu0 0
      %1777 = vmatprep.mubr.bf16.mxu0 0
      %1778 = vmatmul.mubr.bf16.gmra.mrb[0].mxu0 %v1647
      %v1779 = vpop.f32.mrb[0].mxu0
      %v1780 = vadd.f32 0.0, %v1779
      %v1781 = vpop.f32.mrb[0].mxu0
      %v1782 = vpop.f32.mrb[0].mxu0
      %v1783 = vadd.f32 0.0, %v1782
      %v1784 = vpop.f32.mrb[0].mxu0
      %1785 = vmatprep.mubr.bf16.mxu0 0
      %1786 = vmatmul.mubr.bf16.gmra.mrb[0].mxu0 %v1740
      %v1787 = vpop.f32.mrb[0].mxu0
      %v1788 = vadd.f32 0.0, %v1787
      %v1789 = vpop.f32.mrb[0].mxu0
      %v1790 = vpop.f32.mrb[0].mxu0
      %v1791 = vadd.f32 0.0, %v1790
      %v1792 = vpop.f32.mrb[0].mxu0
      %1793 = vdwg.mxu0
      %v1794 = vadd.f32 %v1687, %v1780
      %v1795 = vadd.f32 %v1690, %v1783
      %v1796 = vadd.f32 %v1695, %v1788
      %v1797 = vadd.f32 %v1698, %v1791
      %v1798 = vld [vmem:[%s7] sm:$0x1]
      %v1800 = vlaneseq
      %v1801 = vshrl.u32 %v1800, 7
      %v1802 = vsub.s32 0, %v1801
      %v1803 = vrot.slane %v1798, %v1802
      %v1805 = vmul.f32 %v1794, %v1803
      %v1806 = vmul.f32 %v1795, %v1803
      %v1807 = vmul.f32 %v1796, %v1803
      %v1808 = vmul.f32 %v1797, %v1803
      %v1809 = vld [vmem:[%s8] sm:$0x1]
      %v1811 = vlaneseq
      %v1812 = vshrl.u32 %v1811, 7
      %v1813 = vsub.s32 0, %v1812
      %v1814 = vrot.slane %v1809, %v1813
      %v1816 = vadd.f32 %v1805, %v1814
      %v1817 = vadd.f32 %v1806, %v1814
      %v1818 = vadd.f32 %v1807, %v1814
      %v1819 = vadd.f32 %v1808, %v1814
      %v1820 = vmax.f32 %v1816, 0.0
      %v1821 = vmax.f32 %v1817, 0.0
      %v1822 = vmax.f32 %v1818, 0.0
      %v1823 = vmax.f32 %v1819, 0.0
      %1824 = vst.msk [vmem:[%s498] sm:$0xff] %vm899, %v1820
      %1825 = vst.msk [vmem:[%s498 + $0x8] sm:$0xff] %vm899, %v1821
      %1826 = vst.msk [vmem:[%s498 + $0x10] sm:$0xff] %vm899, %v1822
      %1827 = vst.msk [vmem:[%s498 + $0x18] sm:$0xff] %vm899, %v1823
      %s1828 = smul.u32 4, %s25
      %p1829 = scmp.lt.s32.totalorder %s24, 1
      %s1830 = scalar_select %p1829, %s24, 1
      %p1831 = scmp.lt.s32.totalorder %s1828, 7
      %s1832 = scalar_select %p1831, %s1828, 7
      %s1833 = smul.addr %s1830, 8
      %s1834 = sadd.s32 %s1832, %s1833
      %s1835 = smul.addr %s1834, 8
      %s1836 = scalar_lea.vmem %s9, %s1835
      // Predicated region
      $region65: #{down_forward.1} parent=55 // pred_check
        %p1837 = pneg %p278
      $region66: #{down_forward.1} parent=55 // pred_check_branch
        %1839 = sbr.rel (%p1837) target = $region68
      $region67: #{down_forward.1} parent=55 // pred_region
        %s1840 = smul.u32 4, %s25
      $region68: #{down_forward.1} parent=55 // pred_fallthru
        _
    $region56: #{down_forward.1} parent=5 // pred_fallthru
      _
    %p1841 = scmp.le.s32.totalorder 2, %s15
    // Predicated region
    $region69: #{down_forward.1} parent=5 // pred_check
      %p1842 = pneg %p1841
    $region70: #{down_forward.1} parent=5 // pred_check_branch
      %1844 = sbr.rel (%p1842) target = $region72
    $region71: #{down_forward.1} parent=5 // pred_region
      %s1845 = ssub.s32 %s15, 2
      // Predicated region
      $region73: #{down_forward.1} parent=71 // pred_check
        %p1846 = pneg %p284
      $region74: #{down_forward.1} parent=71 // pred_check_branch
        %1848 = sbr.rel (%p1846) target = $region76
      $region75: #{down_forward.1} parent=71 // pred_region
        %s1849 = smul.u32 4, %s27
        %p1850 = scmp.lt.s32.totalorder %s26, 1
        %s1851 = scalar_select %p1850, %s26, 1
        %p1852 = scmp.lt.s32.totalorder %s1849, 7
        %s1853 = scalar_select %p1852, %s1849, 7
        %s1854 = smul.addr %s1851, 8
        %s1855 = sadd.s32 %s1853, %s1854
        %s1856 = smul.addr %s1855, 8
        %s1857 = scalar_lea.vmem %s9, %s1856
      $region76: #{down_forward.1} parent=71 // pred_fallthru
        _
    $region72: #{down_forward.1} parent=5 // pred_fallthru
      _
  $region6: #{down_forward.1} parent=0 // loop_footer
    %s19 = sadd.s32 1, %s15
  $region7: #{down_forward.1} parent=0 // loop_footer_branch
    %14 = sbr.rel target = $region3
  $region8: #{down_forward.1} parent=0 // loop_exit
    _

</llo_original>
